<compile_context>
chip_gen: v7x
topology: tpu7x:2x2x1
jax: 0.10.0
libtpu: 0.0.40
codegen_flags: <defaults>
</compile_context>

<pallas_src>
import functools

import jax
import jax.numpy as jnp
from jax.experimental import pallas as pl
from jax.experimental.pallas import tpu as pltpu


def _round_up(v, m):
    return (v + m - 1) // m * m


# ------------------------------ Pallas kernel ------------------------------ #

def _convup_kernel(L, Wp, x_ref, w_ref, b_ref, o_ref):
    """Fused ConvTranspose2d(k=3, s=2, p=1) + bias + ReLU via phase decomposition.

    x_ref : (1, Lpad_in, C_in)  f32   zero-padded NHWC input, flattened over (H+1, W+1)
    w_ref : (4, C_in, Npad)     bf16  per-tap weight slabs, 4 output phases packed on lanes
    b_ref : (1, Npad)           f32   bias replicated per phase (zeros in lane padding)
    o_ref : (1, L, Npad)        f32   four phase images (flattened rows), lane-dense

    Tap t of flattened output row i reads input row i + off[t] with
    off = {0, 1, Wp, Wp+1}  (Wp = W + 1), i.e. x[q,r], x[q,r+1], x[q+1,r], x[q+1,r+1].
    """
    bf = jnp.bfloat16
    x00 = x_ref[0, 0:L, :].astype(bf)                  # x[q  , r  ]
    x01 = x_ref[0, 1:1 + L, :].astype(bf)              # x[q  , r+1]
    x10 = x_ref[0, Wp:Wp + L, :].astype(bf)            # x[q+1, r  ]
    x11 = x_ref[0, Wp + 1:Wp + 1 + L, :].astype(bf)    # x[q+1, r+1]

    acc = jnp.dot(x00, w_ref[0], preferred_element_type=jnp.float32)
    acc += jnp.dot(x01, w_ref[1], preferred_element_type=jnp.float32)
    acc += jnp.dot(x10, w_ref[2], preferred_element_type=jnp.float32)
    acc += jnp.dot(x11, w_ref[3], preferred_element_type=jnp.float32)

    o_ref[0] = jnp.maximum(acc + b_ref[...], 0.0)      # bias + ReLU epilogue


# ----------------------- weight packing (tiny, one-time) -------------------- #

def _pack_weights_s2k3p1(w, n_pad):
    """PyTorch ConvTranspose2d weight (C_in, C_out, 3, 3) -> (4, C_in, n_pad) bf16.

    Row index   = input tap: 0:x[q,r]  1:x[q,r+1]  2:x[q+1,r]  3:x[q+1,r+1]
    Lane blocks = output phases [(0,0), (0,1), (1,0), (1,1)], each C_out wide.
    Derived from  oh = 2*ih - 1 + kh  (stride 2, padding 1, kernel 3).
    """
    C_in, C_out = w.shape[0], w.shape[1]
    Z = jnp.zeros((C_in, C_out), w.dtype)
    t = lambda kh, kw: w[:, :, kh, kw]
    s0 = jnp.concatenate([t(1, 1), t(1, 2), t(2, 1), t(2, 2)], axis=1)
    s1 = jnp.concatenate([Z,       t(1, 0), Z,       t(2, 0)], axis=1)
    s2 = jnp.concatenate([Z,       Z,       t(0, 1), t(0, 2)], axis=1)
    s3 = jnp.concatenate([Z,       Z,       Z,       t(0, 0)], axis=1)
    wp = jnp.stack([s0, s1, s2, s3], axis=0)                    # (4, C_in, 4*C_out)
    wp = jnp.pad(wp, ((0, 0), (0, 0), (0, n_pad - 4 * C_out)))
    return wp.astype(jnp.bfloat16)


# ------------------------------- model wrapper ------------------------------ #

def conv_up2d(x, w, b, kernel_size=3, stride=2, padding=1):
    """ReLU(ConvTranspose2d(x; w, b)).  x: (B, C_in, H, W) NCHW (PyTorch layout)."""
    # TODO(synk): only the module's default config (k=3, s=2, p=1) is lowered to the
    # phase-decomposition Pallas kernel; other configs would need a different phase plan.
    assert (kernel_size, stride, padding) == (3, 2, 1)
    B, C_in, H, W = x.shape
    C_out = w.shape[1]
    OH = (H - 1) * stride + kernel_size - 2 * padding            # = 2H - 1
    OW = (W - 1) * stride + kernel_size - 2 * padding            # = 2W - 1

    Hp, Wp = H + 1, W + 1                                        # +1 zero row / col
    n_used = 4 * C_out                                           # 4 phases on lanes
    n_pad = _round_up(n_used, 128)                               # lane-dense output width
    L_out = _round_up(Hp * Wp, 8)                                # flattened output rows
    Lpad_in = _round_up(L_out + Wp + 1, 8)                       # keeps all taps in-bounds

    # Layout conversion happens ONLY at the external boundary:
    # NCHW -> NHWC, one zero row/col (bottom/right), flatten (H+1, W+1) -> rows.
    x_nhwc = jnp.pad(jnp.transpose(x, (0, 2, 3, 1)).astype(jnp.float32),
                     ((0, 0), (0, 1), (0, 1), (0, 0)))           # (B, Hp, Wp, C_in)
    x_flat = x_nhwc.reshape(B, Hp * Wp, C_in)
    x_flat = jnp.pad(x_flat, ((0, 0), (0, Lpad_in - Hp * Wp), (0, 0)))

    wp = _pack_weights_s2k3p1(w, n_pad)                          # (4, C_in, n_pad) bf16
    bp = jnp.pad(jnp.tile(b.astype(jnp.float32), 4),
                 (0, n_pad - n_used)).reshape(1, n_pad)          # (1, n_pad) f32

    phases = pl.pallas_call(
        functools.partial(_convup_kernel, L_out, Wp),
        out_shape=jax.ShapeDtypeStruct((B, L_out, n_pad), jnp.float32),
        grid=(B,),
        in_specs=[
            pl.BlockSpec((1, Lpad_in, C_in), lambda bb: (bb, 0, 0)),
            pl.BlockSpec((4, C_in, n_pad), lambda bb: (0, 0, 0)),
            pl.BlockSpec((1, n_pad), lambda bb: (0, 0)),
        ],
        out_specs=pl.BlockSpec((1, L_out, n_pad), lambda bb: (bb, 0, 0)),
        compiler_params=pltpu.CompilerParams(dimension_semantics=("parallel",)),
    )(x_flat, wp, bp)

    # Layout plumbing (outside the kernel): drop padded rows/cols, interleave phases.
    ph = phases[:, :Hp * Wp, :n_used].reshape(B, Hp, Wp, 4, C_out)
    y = jnp.zeros((B, OH, OW, C_out), jnp.float32)
    y = y.at[:, 0::2, 0::2, :].set(ph[:, :H, :W, 0, :])
    y = y.at[:, 0::2, 1::2, :].set(ph[:, :H, :W - 1, 1, :])
    y = y.at[:, 1::2, 0::2, :].set(ph[:, :H - 1, :W, 2, :])
    y = y.at[:, 1::2, 1::2, :].set(ph[:, :H - 1, :W - 1, 3, :])
    return jnp.transpose(y, (0, 3, 1, 2))                        # back to NCHW


# ------------------------------ pure-JAX reference -------------------------- #

def conv_up2d_reference(x, w, b, stride=2, padding=1):
    """ReLU(ConvTranspose2d) via input-dilated conv (ground truth)."""
    C_in, C_out, kh, kw = w.shape
    w_conv = jnp.flip(w, (2, 3)).transpose(1, 0, 2, 3)           # (C_out, C_in, kh, kw)
    y = jax.lax.conv_general_dilated(
        x, w_conv, window_strides=(1, 1),
        padding=[(kh - 1 - padding,) * 2, (kw - 1 - padding,) * 2],
        lhs_dilation=(stride, stride),
        dimension_numbers=("NCHW", "OIHW", "NCHW"))
    return jax.nn.relu(y + b.reshape(1, C_out, 1, 1))


# ----------------------------------- main ----------------------------------- #

if __name__ == "__main__":
    key = jax.random.PRNGKey(0)
    kx, kw, kb = jax.random.split(key, 3)

    B, C_in, C_out, H, W = 2, 8, 32, 16, 16                      # 4*C_out = 128 lanes exactly
    x = jax.random.normal(kx, (B, C_in, H, W), jnp.float32)
    bound = 1.0 / jnp.sqrt(jnp.float32(C_out * 3 * 3))           # PyTorch-style uniform init
    w = jax.random.uniform(kw, (C_in, C_out, 3, 3), jnp.float32, -bound, bound)
    b = jax.random.uniform(kb, (C_out,), jnp.float32, -bound, bound)

    fwd = jax.jit(conv_up2d)
    out = fwd(x, w, b)
    jax.block_until_ready(out)

    assert out.shape == (B, C_out, 2 * H - 1, 2 * W - 1), out.shape
    assert out.dtype == jnp.float32
    assert bool(jnp.all(jnp.isfinite(out)))

    ref = conv_up2d_reference(x, w, b)
    max_err = float(jnp.max(jnp.abs(out - ref)))
    assert bool(jnp.allclose(out, ref, atol=5e-2, rtol=5e-2)), max_err

    print("KERNEL_OK")
</pallas_src>

<mosaic_0001>
module attributes {stable_mosaic.version = 11 : i64} {
  func.func @_convup_kernel(%arg0: i32, %arg1: memref<1x320x8xf32, #tpu.memory_space<vmem>>, %arg2: memref<4x8x128xbf16, #tpu.memory_space<vmem>>, %arg3: memref<1x128xf32, #tpu.memory_space<vmem>>, %arg4: memref<1x296x128xf32, #tpu.memory_space<vmem>>) attributes {dimension_semantics = [#tpu.dimension_semantics<parallel>], iteration_bounds = array<i64: 2>, scalar_prefetch = 0 : i64, scratch_operands = 0 : i64, tpu.core_type = #tpu.core_type<tc>, window_params = [{transform_indices = @transform_0, window_bounds = array<i64: 1, 320, 8>}, {pipeline_mode = #tpu.pipeline_mode<synchronous>, transform_indices = @transform_1, window_bounds = array<i64: 4, 8, 128>}, {pipeline_mode = #tpu.pipeline_mode<synchronous>, transform_indices = @transform_2, window_bounds = array<i64: 1, 128>}, {transform_indices = @transform_3, window_bounds = array<i64: 1, 296, 128>}]} {
    %c0 = arith.constant 0 : index
    %c0_0 = arith.constant 0 : index
    %c0_1 = arith.constant 0 : index
    %0 = vector.load %arg1[%c0, %c0_0, %c0_1] : memref<1x320x8xf32, #tpu.memory_space<vmem>>, vector<1x296x8xf32>
    %1 = vector.shape_cast %0 : vector<1x296x8xf32> to vector<296x8xf32>
    %2 = arith.truncf %1 : vector<296x8xf32> to vector<296x8xbf16>
    %c0_2 = arith.constant 0 : index
    %c1 = arith.constant 1 : index
    %c0_3 = arith.constant 0 : index
    %3 = vector.load %arg1[%c0_2, %c1, %c0_3] : memref<1x320x8xf32, #tpu.memory_space<vmem>>, vector<1x296x8xf32>
    %4 = vector.shape_cast %3 : vector<1x296x8xf32> to vector<296x8xf32>
    %5 = arith.truncf %4 : vector<296x8xf32> to vector<296x8xbf16>
    %c0_4 = arith.constant 0 : index
    %c17 = arith.constant 17 : index
    %c0_5 = arith.constant 0 : index
    %6 = vector.load %arg1[%c0_4, %c17, %c0_5] : memref<1x320x8xf32, #tpu.memory_space<vmem>>, vector<1x296x8xf32>
    %7 = vector.shape_cast %6 : vector<1x296x8xf32> to vector<296x8xf32>
    %8 = arith.truncf %7 : vector<296x8xf32> to vector<296x8xbf16>
    %c0_6 = arith.constant 0 : index
    %c18 = arith.constant 18 : index
    %c0_7 = arith.constant 0 : index
    %9 = vector.load %arg1[%c0_6, %c18, %c0_7] : memref<1x320x8xf32, #tpu.memory_space<vmem>>, vector<1x296x8xf32>
    %10 = vector.shape_cast %9 : vector<1x296x8xf32> to vector<296x8xf32>
    %11 = arith.truncf %10 : vector<296x8xf32> to vector<296x8xbf16>
    %c0_8 = arith.constant 0 : index
    %c0_9 = arith.constant 0 : index
    %c0_10 = arith.constant 0 : index
    %12 = vector.load %arg2[%c0_8, %c0_9, %c0_10] : memref<4x8x128xbf16, #tpu.memory_space<vmem>>, vector<1x8x128xbf16>
    %13 = vector.shape_cast %12 : vector<1x8x128xbf16> to vector<8x128xbf16>
    %cst = arith.constant dense<0.000000e+00> : vector<296x128xf32>
    %14 = tpu.matmul %2, %13, %cst {dimension_numbers = #tpu.dot_dimension_numbers<[1], [0], [0], [1], [0, 0, 1, 1], [], []>} : vector<296x8xbf16>, vector<8x128xbf16>, vector<296x128xf32> -> vector<296x128xf32>
    %c1_11 = arith.constant 1 : index
    %c0_12 = arith.constant 0 : index
    %c0_13 = arith.constant 0 : index
    %15 = vector.load %arg2[%c1_11, %c0_12, %c0_13] : memref<4x8x128xbf16, #tpu.memory_space<vmem>>, vector<1x8x128xbf16>
    %16 = vector.shape_cast %15 : vector<1x8x128xbf16> to vector<8x128xbf16>
    %cst_14 = arith.constant dense<0.000000e+00> : vector<296x128xf32>
    %17 = tpu.matmul %5, %16, %cst_14 {dimension_numbers = #tpu.dot_dimension_numbers<[1], [0], [0], [1], [0, 0, 1, 1], [], []>} : vector<296x8xbf16>, vector<8x128xbf16>, vector<296x128xf32> -> vector<296x128xf32>
    %18 = arith.addf %14, %17 : vector<296x128xf32>
    %c2 = arith.constant 2 : index
    %c0_15 = arith.constant 0 : index
    %c0_16 = arith.constant 0 : index
    %19 = vector.load %arg2[%c2, %c0_15, %c0_16] : memref<4x8x128xbf16, #tpu.memory_space<vmem>>, vector<1x8x128xbf16>
    %20 = vector.shape_cast %19 : vector<1x8x128xbf16> to vector<8x128xbf16>
    %cst_17 = arith.constant dense<0.000000e+00> : vector<296x128xf32>
    %21 = tpu.matmul %8, %20, %cst_17 {dimension_numbers = #tpu.dot_dimension_numbers<[1], [0], [0], [1], [0, 0, 1, 1], [], []>} : vector<296x8xbf16>, vector<8x128xbf16>, vector<296x128xf32> -> vector<296x128xf32>
    %22 = arith.addf %18, %21 : vector<296x128xf32>
    %c3 = arith.constant 3 : index
    %c0_18 = arith.constant 0 : index
    %c0_19 = arith.constant 0 : index
    %23 = vector.load %arg2[%c3, %c0_18, %c0_19] : memref<4x8x128xbf16, #tpu.memory_space<vmem>>, vector<1x8x128xbf16>
    %24 = vector.shape_cast %23 : vector<1x8x128xbf16> to vector<8x128xbf16>
    %cst_20 = arith.constant dense<0.000000e+00> : vector<296x128xf32>
    %25 = tpu.matmul %11, %24, %cst_20 {dimension_numbers = #tpu.dot_dimension_numbers<[1], [0], [0], [1], [0, 0, 1, 1], [], []>} : vector<296x8xbf16>, vector<8x128xbf16>, vector<296x128xf32> -> vector<296x128xf32>
    %26 = arith.addf %22, %25 : vector<296x128xf32>
    %c0_21 = arith.constant 0 : index
    %c0_22 = arith.constant 0 : index
    %27 = vector.load %arg3[%c0_21, %c0_22] : memref<1x128xf32, #tpu.memory_space<vmem>>, vector<1x128xf32>
    %28 = vector.broadcast %27 : vector<1x128xf32> to vector<296x128xf32>
    %29 = arith.addf %26, %28 : vector<296x128xf32>
    %cst_23 = arith.constant 0.000000e+00 : f32
    %30 = vector.broadcast %cst_23 : f32 to vector<296x128xf32>
    %31 = arith.maximumf %29, %30 : vector<296x128xf32>
    %c0_24 = arith.constant 0 : index
    %c0_25 = arith.constant 0 : index
    %c0_26 = arith.constant 0 : index
    %32 = vector.load %arg4[%c0_24, %c0_25, %c0_26] : memref<1x296x128xf32, #tpu.memory_space<vmem>>, vector<1x296x128xf32>
    %33 = vector.shape_cast %32 : vector<1x296x128xf32> to vector<296x128xf32>
    %34 = vector.shape_cast %31 : vector<296x128xf32> to vector<1x296x128xf32>
    tpu.vector_store %arg4[%c0_24, %c0_25, %c0_26], %34 {strides = array<i32>} : memref<1x296x128xf32, #tpu.memory_space<vmem>>, vector<1x296x128xf32>,
    return
  }
  func.func @transform_0(%arg0: i32) -> (i32, i32, i32) {
    %c0_i32 = arith.constant 0 : i32
    %c0_i32_0 = arith.constant 0 : i32
    %c0_i32_1 = arith.constant 0 : i32
    return %arg0, %c0_i32, %c0_i32_0 : i32, i32, i32
  }
  func.func @transform_1(%arg0: i32) -> (i32, i32, i32) {
    %c0_i32 = arith.constant 0 : i32
    %c0_i32_0 = arith.constant 0 : i32
    %c0_i32_1 = arith.constant 0 : i32
    %c0_i32_2 = arith.constant 0 : i32
    return %c0_i32, %c0_i32_0, %c0_i32_1 : i32, i32, i32
  }
  func.func @transform_2(%arg0: i32) -> (i32, i32) {
    %c0_i32 = arith.constant 0 : i32
    %c0_i32_0 = arith.constant 0 : i32
    %c0_i32_1 = arith.constant 0 : i32
    return %c0_i32, %c0_i32_0 : i32, i32
  }
  func.func @transform_3(%arg0: i32) -> (i32, i32, i32) {
    %c0_i32 = arith.constant 0 : i32
    %c0_i32_0 = arith.constant 0 : i32
    %c0_i32_1 = arith.constant 0 : i32
    return %arg0, %c0_i32, %c0_i32_0 : i32, i32, i32
  }
}

</mosaic_0001>

<llo_original>
// kernel: tile.8
$region0: #{tile.8}
  #allocation2 [shape = 's32[1]{0}', space=sflag, size = 0x4, scoped, tag = 'scoped memory for tile.8']
  %s0 = inlined_call_operand.hbm [shape: f32[32], index: 0, kind: input, shape index: {}]
  %s1 = inlined_call_operand.vmem [shape: f32[4,32], index: 1, kind: output, shape index: {}]
  $region1: #{tile.8} parent=0
    #allocation0 [shape = 'u8[512]{0}', space=vmem, size = 0x400, scoped, tag = 'operand span for operand 0']
    #allocation1 [shape = 's32[1]{0}', space=sflag, size = 0x4, scoped, tag = 'scoped memory for tile.8']
    %2 = vsyncpa [#allocation1], 0
    // Predicated region
    $region2: #{tile.8} parent=1 // pred_check
      _
    $region3: #{tile.8} parent=1 // pred_check_branch
      %4 = sbr.rel (0) target = $region5
    $region4: #{tile.8} parent=1 // pred_region
      %s6 = ssub.s32 16, 16
      %7 = vsyncadd [#allocation1], %s6
      %s9 = sshll.u32 [#allocation0], 4
      %s10 = int_to_ptr.vmem [resolvable:$true] %s9
      %12 = dma.hbm_to_vmem [thread:$0]  %s0, 16, %s10, [#allocation1]
    $region5: #{tile.8} parent=1 // pred_fallthru
      _
    // Predicated region
    $region6: #{tile.8} parent=1 // pred_check
      _
    $region7: #{tile.8} parent=1 // pred_check_branch
      %14 = sbr.rel (0) target = $region9
    $region8: #{tile.8} parent=1 // pred_region
      %15 = dma.done [#allocation1], 16
    $region9: #{tile.8} parent=1 // pred_fallthru
      _
    %v16 = vld [vmem:[#allocation0] ss:$0 sm:$0xff]
    %17 = vst [vmem:[%s1] sm:$0xf] %v16
    %18 = vsyncpa [#allocation1], 1

// kernel: conv_up2d.1
$region0: #{conv_up2d.1}
  #allocation0 [shape = 'u32[]', space=smem, size = 0x4, offset = 0x4, fixed_abs, tag = 'smem constant byte address 0x4 - core index']
  #allocation1 [shape = 'u32[144,128]{1,0:T(1,128)}', space=vmem, size = 0x12000, scoped, tag = 'internal scratch']
  %s0 = inlined_call_operand.vmem [shape: f32[2,320,8], index: 0, kind: input, shape index: {}]
  %s1 = inlined_call_operand.vmem [shape: bf16[4,8,128], index: 1, kind: input, shape index: {}]
  %s2 = inlined_call_operand.vmem [shape: f32[1,128], index: 2, kind: input, shape index: {}]
  %s3 = inlined_call_operand.vmem [shape: f32[2,296,128], index: 3, kind: output, shape index: {}]
  %s4 = sld [smem:[#allocation0]]
  $region45: #{conv_up2d.1} parent=0
    _
  %s6 = ssub.s32 1, %s4
  %s7 = scalar_select 0, %s6, %s4
  loop: start=0, step=1, limit=4
  $region2: #{conv_up2d.1} parent=0 // loop_pre_header
    _
  $region3: #{conv_up2d.1} parent=0 // loop_header
    %s9 = sphi 0, %s13
    %p10 = scmp.ge.s32.totalorder %s9, 4
    %s19 = sphi 0, %s21
    %s22 = sphi 0, %s19
    %s23 = sphi 0, %s22
    %s39 = sphi 0, %s23
    %s43 = sphi 0, %s43
    %s45 = sphi 0, %s43
    %s46 = sphi 0, %s45
    %s60 = sphi 0, %s46
    %s64 = sphi 0, %s64
    %s66 = sphi 0, %s64
    %s67 = sphi 0, %s66
    %s81 = sphi 0, %s67
    %s87 = sphi 0, %s89
    %s90 = sphi 0, %s87
    %s91 = sphi 0, %s90
    %s107 = sphi 0, %s91
  $region4: #{conv_up2d.1} parent=0 // loop_header_branch
    %12 = sbr.rel (%p10) target = $region8
  $region5: #{conv_up2d.1} parent=0 // loop_body
    %s14 = ssub.s32 %s9, 1
    %s15 = ssub.s32 %s9, 2
    %s16 = sadd.s32 %s9, 1
    %s17 = ssub.s32 %s9, %s16
    %p18 = scmp.eq.s32.totalorder %s17, 0
    %s20 = sadd.s32 %s19, 1
    %s21 = scalar_select %p18, %s19, %s20
    %p24 = pneg %p18
    %p25 = scmp.eq.s32.totalorder %s9, 1
    %p26 = por %p24, %p25
    %p27 = scmp.ne.s32.totalorder %s19, %s22
    %p28 = scmp.eq.s32.totalorder %s9, 0
    %p29 = por %p27, %p28
    %p30 = scmp.ne.s32.totalorder %s19, %s22
    %p31 = scmp.eq.s32.totalorder %s14, 1
    %p32 = por %p30, %p31
    %p33 = scmp.ne.s32.totalorder %s22, %s23
    %p34 = scmp.eq.s32.totalorder %s14, 0
    %p35 = por %p33, %p34
    %p36 = scmp.ne.s32.totalorder %s22, %s23
    %p37 = scmp.eq.s32.totalorder %s15, 1
    %p38 = por %p36, %p37
    %p40 = scmp.ne.s32.totalorder %s23, %s39
    %p41 = scmp.eq.s32.totalorder %s15, 0
    %p42 = por %p40, %p41
    %s44 = sadd.s32 %s43, 1
    %p47 = scmp.eq.s32.totalorder %s9, 1
    %p48 = scmp.ne.s32.totalorder %s43, %s45
    %p49 = scmp.eq.s32.totalorder %s9, 0
    %p50 = por %p48, %p49
    %p51 = scmp.ne.s32.totalorder %s43, %s45
    %p52 = scmp.eq.s32.totalorder %s14, 1
    %p53 = por %p51, %p52
    %p54 = scmp.ne.s32.totalorder %s45, %s46
    %p55 = scmp.eq.s32.totalorder %s14, 0
    %p56 = por %p54, %p55
    %p57 = scmp.ne.s32.totalorder %s45, %s46
    %p58 = scmp.eq.s32.totalorder %s15, 1
    %p59 = por %p57, %p58
    %p61 = scmp.ne.s32.totalorder %s46, %s60
    %p62 = scmp.eq.s32.totalorder %s15, 0
    %p63 = por %p61, %p62
    %s65 = sadd.s32 %s64, 1
    %p68 = scmp.eq.s32.totalorder %s9, 1
    %p69 = scmp.ne.s32.totalorder %s64, %s66
    %p70 = scmp.eq.s32.totalorder %s9, 0
    %p71 = por %p69, %p70
    %p72 = scmp.ne.s32.totalorder %s64, %s66
    %p73 = scmp.eq.s32.totalorder %s14, 1
    %p74 = por %p72, %p73
    %p75 = scmp.ne.s32.totalorder %s66, %s67
    %p76 = scmp.eq.s32.totalorder %s14, 0
    %p77 = por %p75, %p76
    %p78 = scmp.ne.s32.totalorder %s66, %s67
    %p79 = scmp.eq.s32.totalorder %s15, 1
    %p80 = por %p78, %p79
    %p82 = scmp.ne.s32.totalorder %s67, %s81
    %p83 = scmp.eq.s32.totalorder %s15, 0
    %p84 = por %p82, %p83
    %s85 = ssub.s32 %s9, %s16
    %p86 = scmp.eq.s32.totalorder %s85, 0
    %s88 = sadd.s32 %s87, 1
    %s89 = scalar_select %p86, %s87, %s88
    %p92 = pneg %p86
    %p93 = scmp.eq.s32.totalorder %s9, 1
    %p94 = por %p92, %p93
    %p95 = scmp.ne.s32.totalorder %s87, %s90
    %p96 = scmp.eq.s32.totalorder %s9, 0
    %p97 = por %p95, %p96
    %p98 = scmp.ne.s32.totalorder %s87, %s90
    %p99 = scmp.eq.s32.totalorder %s14, 1
    %p100 = por %p98, %p99
    %p101 = scmp.ne.s32.totalorder %s90, %s91
    %p102 = scmp.eq.s32.totalorder %s14, 0
    %p103 = por %p101, %p102
    %p104 = scmp.ne.s32.totalorder %s90, %s91
    %p105 = scmp.eq.s32.totalorder %s15, 1
    %p106 = por %p104, %p105
    %p108 = scmp.ne.s32.totalorder %s91, %s107
    %p109 = scmp.eq.s32.totalorder %s15, 0
    %p110 = por %p108, %p109
    %p111 = scmp.le.s32.totalorder 1, %s9
    %p112 = scmp.lt.s32.totalorder %s9, 3
    %p113 = pnand %p111, %p112
    %p114 = pneg %p113
    // Predicated region
    $region9: #{conv_up2d.1} parent=5 // pred_check
      _
    $region10: #{conv_up2d.1} parent=5 // pred_check_branch
      %116 = sbr.rel (%p113) target = $region12
    $region11: #{conv_up2d.1} parent=5 // pred_region
      %s117 = ssub.s32 %s9, 1
      // Predicated region
      $region13: #{conv_up2d.1} parent=11 // pred_check
        %p118 = pneg %p56
      $region14: #{conv_up2d.1} parent=11 // pred_check_branch
        %120 = sbr.rel (%p118) target = $region16
      $region15: #{conv_up2d.1} parent=11 // pred_region
        _
      $region16: #{conv_up2d.1} parent=11 // pred_fallthru
        _
      // Predicated region
      $region17: #{conv_up2d.1} parent=11 // pred_check
        %p121 = pneg %p77
      $region18: #{conv_up2d.1} parent=11 // pred_check_branch
        %123 = sbr.rel (%p121) target = $region20
      $region19: #{conv_up2d.1} parent=11 // pred_region
        _
      $region20: #{conv_up2d.1} parent=11 // pred_fallthru
        _
    $region12: #{conv_up2d.1} parent=5 // pred_fallthru
      _
    %p124 = scmp.lt.s32.totalorder %s9, 2
    // Predicated region
    $region21: #{conv_up2d.1} parent=5 // pred_check
      %p125 = pneg %p124
    $region22: #{conv_up2d.1} parent=5 // pred_check_branch
      %127 = sbr.rel (%p125) target = $region24
    $region23: #{conv_up2d.1} parent=5 // pred_region
      // Predicated region
      $region25: #{conv_up2d.1} parent=23 // pred_check
        %p128 = pneg %p29
      $region26: #{conv_up2d.1} parent=23 // pred_check_branch
        %130 = sbr.rel (%p128) target = $region28
      $region27: #{conv_up2d.1} parent=23 // pred_region
        %p131 = scmp.lt.s32.totalorder %s9, 1
        %s132 = scalar_select %p131, %s9, 1
        %s133 = smul.addr %s132, 40
        %s134 = smul.addr %s133, 8
        %s135 = scalar_lea.vmem %s0, %s134
      $region28: #{conv_up2d.1} parent=23 // pred_fallthru
        _
    $region24: #{conv_up2d.1} parent=5 // pred_fallthru
      _
    %p136 = scmp.le.s32.totalorder 1, %s9
    %p137 = scmp.lt.s32.totalorder %s9, 3
    %p138 = pnand %p136, %p137
    %p139 = pneg %p138
    // Predicated region
    $region29: #{conv_up2d.1} parent=5 // pred_check
      _
    $region30: #{conv_up2d.1} parent=5 // pred_check_branch
      %141 = sbr.rel (%p138) target = $region32
    $region31: #{conv_up2d.1} parent=5 // pred_region
      %s142 = ssub.s32 %s9, 1
      %p143 = scmp.lt.s32.totalorder %s14, 1
      %s144 = scalar_select %p143, %s14, 1
      %s145 = smul.addr %s144, 40
      %s146 = smul.addr %s145, 8
      %s147 = scalar_lea.vmem %s0, %s146
      %p148 = pneg %p35
      %p149 = pneg %p32
      %p150 = pneg %p56
      %p151 = pneg %p53
      %p152 = pneg %p77
      %p153 = pneg %p74
      %p154 = pneg %p103
      %p155 = pneg %p100
      %p156 = scmp.lt.s32.totalorder %s14, 1
      %s157 = scalar_select %p156, %s14, 1
      %s158 = smul.addr %s157, 37
      %s159 = smul.addr %s158, 8
      %s160 = scalar_lea.vmem %s3, %s159
      %p161 = scmp.lt.s32.totalorder %s14, 1
      %s162 = scalar_select %p161, %s14, 1
      %s163 = smul.addr %s162, 40
      %s164 = smul.addr %s163, 8
      %s165 = scalar_lea.vmem %s0, %s164
      %p166 = scmp.lt.s32.totalorder %s14, 1
      %s167 = scalar_select %p166, %s14, 1
      %s168 = smul.addr %s167, 37
      %s169 = smul.addr %s168, 8
      %s170 = scalar_lea.vmem %s3, %s169
      %v172 = vld [vmem:[%s165] sm:$0xff]
      %v173 = vld [vmem:[%s165 + $0x8] sm:$0xff]
      %v174 = vld [vmem:[%s165 + $0x10] sm:$0xff]
      %v175 = vld [vmem:[%s165 + $0x18] sm:$0xff]
      %v176 = vld [vmem:[%s165 + $0x20] sm:$0xff]
      %v177 = vld [vmem:[%s165 + $0x28] sm:$0xff]
      %v178 = vld [vmem:[%s165 + $0x30] sm:$0xff]
      %v179 = vld [vmem:[%s165 + $0x38] sm:$0xff]
      %v180 = vld [vmem:[%s165 + $0x40] sm:$0xff]
      %v181 = vld [vmem:[%s165 + $0x48] sm:$0xff]
      %v182 = vld [vmem:[%s165 + $0x50] sm:$0xff]
      %v183 = vld [vmem:[%s165 + $0x58] sm:$0xff]
      %v184 = vld [vmem:[%s165 + $0x60] sm:$0xff]
      %v185 = vld [vmem:[%s165 + $0x68] sm:$0xff]
      %v186 = vld [vmem:[%s165 + $0x70] sm:$0xff]
      %v187 = vld [vmem:[%s165 + $0x78] sm:$0xff]
      %v188 = vld [vmem:[%s165 + $0x80] sm:$0xff]
      %v189 = vld [vmem:[%s165 + $0x88] sm:$0xff]
      %v190 = vld [vmem:[%s165 + $0x90] sm:$0xff]
      %v191 = vld [vmem:[%s165 + $0x98] sm:$0xff]
      %v192 = vld [vmem:[%s165 + $0xa0] sm:$0xff]
      %v193 = vld [vmem:[%s165 + $0xa8] sm:$0xff]
      %v194 = vld [vmem:[%s165 + $0xb0] sm:$0xff]
      %v195 = vld [vmem:[%s165 + $0xb8] sm:$0xff]
      %v196 = vld [vmem:[%s165 + $0xc0] sm:$0xff]
      %v197 = vld [vmem:[%s165 + $0xc8] sm:$0xff]
      %v198 = vld [vmem:[%s165 + $0xd0] sm:$0xff]
      %v199 = vld [vmem:[%s165 + $0xd8] sm:$0xff]
      %v200 = vld [vmem:[%s165 + $0xe0] sm:$0xff]
      %v201 = vld [vmem:[%s165 + $0xe8] sm:$0xff]
      %v202 = vld [vmem:[%s165 + $0xf0] sm:$0xff]
      %v203 = vld [vmem:[%s165 + $0xf8] sm:$0xff]
      %v204 = vld [vmem:[%s165 + $0x100] sm:$0xff]
      %v205 = vld [vmem:[%s165 + $0x108] sm:$0xff]
      %v206 = vld [vmem:[%s165 + $0x110] sm:$0xff]
      %v207 = vld [vmem:[%s165 + $0x118] sm:$0xff]
      %v208 = vld [vmem:[%s165 + $0x120] sm:$0xff]
      %v209 = vpack.c.bf16 %v173, %v172
      %v210 = vpack.c.bf16 %v175, %v174
      %v211 = vpack.c.bf16 %v177, %v176
      %v212 = vpack.c.bf16 %v179, %v178
      %v213 = vpack.c.bf16 %v181, %v180
      %v214 = vpack.c.bf16 %v183, %v182
      %v215 = vpack.c.bf16 %v185, %v184
      %v216 = vpack.c.bf16 %v187, %v186
      %v217 = vpack.c.bf16 %v189, %v188
      %v218 = vpack.c.bf16 %v191, %v190
      %v219 = vpack.c.bf16 %v193, %v192
      %v220 = vpack.c.bf16 %v195, %v194
      %v221 = vpack.c.bf16 %v197, %v196
      %v222 = vpack.c.bf16 %v199, %v198
      %v223 = vpack.c.bf16 %v201, %v200
      %v224 = vpack.c.bf16 %v203, %v202
      %v225 = vpack.c.bf16 %v205, %v204
      %v226 = vpack.c.bf16 %v207, %v206
      %v227 = vpack.c.bf16 %v208, %v208
      %v228 = vld [vmem:[%s165 + $0x1] sm:$0xff]
      %v229 = vld [vmem:[%s165 + $0x9] sm:$0xff]
      %v230 = vld [vmem:[%s165 + $0x11] sm:$0xff]
      %v231 = vld [vmem:[%s165 + $0x19] sm:$0xff]
      %v232 = vld [vmem:[%s165 + $0x21] sm:$0xff]
      %v233 = vld [vmem:[%s165 + $0x29] sm:$0xff]
      %v234 = vld [vmem:[%s165 + $0x31] sm:$0xff]
      %v235 = vld [vmem:[%s165 + $0x39] sm:$0xff]
      %v236 = vld [vmem:[%s165 + $0x41] sm:$0xff]
      %v237 = vld [vmem:[%s165 + $0x49] sm:$0xff]
      %v238 = vld [vmem:[%s165 + $0x51] sm:$0xff]
      %v239 = vld [vmem:[%s165 + $0x59] sm:$0xff]
      %v240 = vld [vmem:[%s165 + $0x61] sm:$0xff]
      %v241 = vld [vmem:[%s165 + $0x69] sm:$0xff]
      %v242 = vld [vmem:[%s165 + $0x71] sm:$0xff]
      %v243 = vld [vmem:[%s165 + $0x79] sm:$0xff]
      %v244 = vld [vmem:[%s165 + $0x81] sm:$0xff]
      %v245 = vld [vmem:[%s165 + $0x89] sm:$0xff]
      %v246 = vld [vmem:[%s165 + $0x91] sm:$0xff]
      %v247 = vld [vmem:[%s165 + $0x99] sm:$0xff]
      %v248 = vld [vmem:[%s165 + $0xa1] sm:$0xff]
      %v249 = vld [vmem:[%s165 + $0xa9] sm:$0xff]
      %v250 = vld [vmem:[%s165 + $0xb1] sm:$0xff]
      %v251 = vld [vmem:[%s165 + $0xb9] sm:$0xff]
      %v252 = vld [vmem:[%s165 + $0xc1] sm:$0xff]
      %v253 = vld [vmem:[%s165 + $0xc9] sm:$0xff]
      %v254 = vld [vmem:[%s165 + $0xd1] sm:$0xff]
      %v255 = vld [vmem:[%s165 + $0xd9] sm:$0xff]
      %v256 = vld [vmem:[%s165 + $0xe1] sm:$0xff]
      %v257 = vld [vmem:[%s165 + $0xe9] sm:$0xff]
      %v258 = vld [vmem:[%s165 + $0xf1] sm:$0xff]
      %v259 = vld [vmem:[%s165 + $0xf9] sm:$0xff]
      %v260 = vld [vmem:[%s165 + $0x101] sm:$0xff]
      %v261 = vld [vmem:[%s165 + $0x109] sm:$0xff]
      %v262 = vld [vmem:[%s165 + $0x111] sm:$0xff]
      %v263 = vld [vmem:[%s165 + $0x119] sm:$0xff]
      %v264 = vld [vmem:[%s165 + $0x121] sm:$0xff]
      %v265 = vpack.c.bf16 %v229, %v228
      %v266 = vpack.c.bf16 %v231, %v230
      %v267 = vpack.c.bf16 %v233, %v232
      %v268 = vpack.c.bf16 %v235, %v234
      %v269 = vpack.c.bf16 %v237, %v236
      %v270 = vpack.c.bf16 %v239, %v238
      %v271 = vpack.c.bf16 %v241, %v240
      %v272 = vpack.c.bf16 %v243, %v242
      %v273 = vpack.c.bf16 %v245, %v244
      %v274 = vpack.c.bf16 %v247, %v246
      %v275 = vpack.c.bf16 %v249, %v248
      %v276 = vpack.c.bf16 %v251, %v250
      %v277 = vpack.c.bf16 %v253, %v252
      %v278 = vpack.c.bf16 %v255, %v254
      %v279 = vpack.c.bf16 %v257, %v256
      %v280 = vpack.c.bf16 %v259, %v258
      %v281 = vpack.c.bf16 %v261, %v260
      %v282 = vpack.c.bf16 %v263, %v262
      %v283 = vpack.c.bf16 %v264, %v264
      %v284 = vld [vmem:[%s165 + $0x129] sm:$0xff]
      %v285 = vld [vmem:[%s165 + $0x131] sm:$0xff]
      %v286 = vpack.c.bf16 %v284, %v264
      %v287 = vpack.c.bf16 %v285, %v285
      %v288 = vld [vmem:[%s165 + $0x12] sm:$0xff]
      %v289 = vld [vmem:[%s165 + $0x1a] sm:$0xff]
      %v290 = vld [vmem:[%s165 + $0x22] sm:$0xff]
      %v291 = vld [vmem:[%s165 + $0x2a] sm:$0xff]
      %v292 = vld [vmem:[%s165 + $0x32] sm:$0xff]
      %v293 = vld [vmem:[%s165 + $0x3a] sm:$0xff]
      %v294 = vld [vmem:[%s165 + $0x42] sm:$0xff]
      %v295 = vld [vmem:[%s165 + $0x4a] sm:$0xff]
      %v296 = vld [vmem:[%s165 + $0x52] sm:$0xff]
      %v297 = vld [vmem:[%s165 + $0x5a] sm:$0xff]
      %v298 = vld [vmem:[%s165 + $0x62] sm:$0xff]
      %v299 = vld [vmem:[%s165 + $0x6a] sm:$0xff]
      %v300 = vld [vmem:[%s165 + $0x72] sm:$0xff]
      %v301 = vld [vmem:[%s165 + $0x7a] sm:$0xff]
      %v302 = vld [vmem:[%s165 + $0x82] sm:$0xff]
      %v303 = vld [vmem:[%s165 + $0x8a] sm:$0xff]
      %v304 = vld [vmem:[%s165 + $0x92] sm:$0xff]
      %v305 = vld [vmem:[%s165 + $0x9a] sm:$0xff]
      %v306 = vld [vmem:[%s165 + $0xa2] sm:$0xff]
      %v307 = vld [vmem:[%s165 + $0xaa] sm:$0xff]
      %v308 = vld [vmem:[%s165 + $0xb2] sm:$0xff]
      %v309 = vld [vmem:[%s165 + $0xba] sm:$0xff]
      %v310 = vld [vmem:[%s165 + $0xc2] sm:$0xff]
      %v311 = vld [vmem:[%s165 + $0xca] sm:$0xff]
      %v312 = vld [vmem:[%s165 + $0xd2] sm:$0xff]
      %v313 = vld [vmem:[%s165 + $0xda] sm:$0xff]
      %v314 = vld [vmem:[%s165 + $0xe2] sm:$0xff]
      %v315 = vld [vmem:[%s165 + $0xea] sm:$0xff]
      %v316 = vld [vmem:[%s165 + $0xf2] sm:$0xff]
      %v317 = vld [vmem:[%s165 + $0xfa] sm:$0xff]
      %v318 = vld [vmem:[%s165 + $0x102] sm:$0xff]
      %v319 = vld [vmem:[%s165 + $0x10a] sm:$0xff]
      %v320 = vld [vmem:[%s165 + $0x112] sm:$0xff]
      %v321 = vld [vmem:[%s165 + $0x11a] sm:$0xff]
      %v322 = vld [vmem:[%s165 + $0x122] sm:$0xff]
      %v323 = vld [vmem:[%s165 + $0x12a] sm:$0xff]
      %v324 = vld [vmem:[%s165 + $0x132] sm:$0xff]
      %v325 = vpack.c.bf16 %v289, %v288
      %v326 = vpack.c.bf16 %v291, %v290
      %v327 = vpack.c.bf16 %v293, %v292
      %v328 = vpack.c.bf16 %v295, %v294
      %v329 = vpack.c.bf16 %v297, %v296
      %v330 = vpack.c.bf16 %v299, %v298
      %v331 = vpack.c.bf16 %v301, %v300
      %v332 = vpack.c.bf16 %v303, %v302
      %v333 = vpack.c.bf16 %v305, %v304
      %v334 = vpack.c.bf16 %v307, %v306
      %v335 = vpack.c.bf16 %v309, %v308
      %v336 = vpack.c.bf16 %v311, %v310
      %v337 = vpack.c.bf16 %v313, %v312
      %v338 = vpack.c.bf16 %v315, %v314
      %v339 = vpack.c.bf16 %v317, %v316
      %v340 = vpack.c.bf16 %v319, %v318
      %v341 = vpack.c.bf16 %v321, %v320
      %v342 = vpack.c.bf16 %v323, %v322
      %v343 = vpack.c.bf16 %v324, %v324
      %v344 = vld [vmem:[%s1] sm:$0xf]
      %s345 = scalar_lea.vmem %s1, 4
      %v346 = vld [vmem:[%s345] sm:$0xf]
      %vm347 = vcmask 64512
      %v349 = vsel %vm347, %v265, 0
      %v352 = vsel %vm347, %v266, 0
      %v355 = vsel %vm347, %v267, 0
      %v358 = vsel %vm347, %v268, 0
      %v361 = vsel %vm347, %v269, 0
      %v364 = vsel %vm347, %v270, 0
      %v367 = vsel %vm347, %v271, 0
      %v370 = vsel %vm347, %v272, 0
      %v373 = vsel %vm347, %v273, 0
      %v376 = vsel %vm347, %v274, 0
      %v379 = vsel %vm347, %v275, 0
      %v382 = vsel %vm347, %v276, 0
      %v385 = vsel %vm347, %v277, 0
      %v388 = vsel %vm347, %v278, 0
      %v391 = vsel %vm347, %v279, 0
      %v394 = vsel %vm347, %v280, 0
      %v397 = vsel %vm347, %v281, 0
      %v400 = vsel %vm347, %v282, 0
      %v403 = vsel %vm347, %v283, 0
      %vm405 = vcmask 1043456
      %v407 = vsel %vm405, %v346, 0
      %409 = vmatprep.subr.bf16.mxu0 0
      %410 = vmatpush1.bf16.msra.mxu0 %v407
      %411 = vmatprep.subr.bf16.mxu0 0
      %412 = vmatpush1.bf16.msra.mxu0 0
      %413 = vmatprep.subr.bf16.mxu0 0
      %414 = vmatpush1.bf16.msra.mxu0 0
      %415 = vmatprep.subr.bf16.mxu0 0
      %416 = vmatpush1.bf16.msra.mxu0 0
      %417 = vmatprep.subr.bf16.mxu0 0
      %418 = vmatpush1.bf16.msra.mxu0 0
      %419 = vmatprep.subr.bf16.mxu0 0
      %420 = vmatpush1.bf16.msra.mxu0 0
      %421 = vmatprep.subr.bf16.mxu0 0
      %422 = vmatpush1.bf16.msra.mxu0 0
      %423 = vmatprep.subr.bf16.mxu0 0
      %424 = vmatpush1.bf16.msra.mxu0 0
      %425 = vmatprep.subr.bf16.mxu0 0
      %426 = vmatpush1.bf16.msra.mxu0 0
      %427 = vmatprep.subr.bf16.mxu0 0
      %428 = vmatpush1.bf16.msra.mxu0 0
      %429 = vmatprep.subr.bf16.mxu0 0
      %430 = vmatpush1.bf16.msra.mxu0 0
      %431 = vmatprep.subr.bf16.mxu0 0
      %432 = vmatpush1.bf16.msra.mxu0 0
      %433 = vmatprep.subr.bf16.mxu0 0
      %434 = vmatpush1.bf16.msra.mxu0 0
      %435 = vmatprep.subr.bf16.mxu0 0
      %436 = vmatpush1.bf16.msra.mxu0 0
      %437 = vmatprep.subr.bf16.mxu0 0
      %438 = vmatpush1.bf16.msra.mxu0 0
      %439 = vmatprep.subr.bf16.mxu0 0
      %440 = vmatpush1.bf16.msra.mxu0 0
      %441 = vmatprep.mubr.bf16.mxu0 0
      %442 = vmatmul.mubr.bf16.gmra.mrb[0].mxu0 %v349
      %v443 = vpop.f32.mrb[0].mxu0
      %v444 = vadd.f32 0.0, %v443
      %v445 = vpop.f32.mrb[0].mxu0
      %v446 = vpop.f32.mrb[0].mxu0
      %v447 = vadd.f32 0.0, %v446
      %v448 = vpop.f32.mrb[0].mxu0
      %449 = vmatprep.mubr.bf16.mxu0 0
      %450 = vmatmul.mubr.bf16.gmra.mrb[0].mxu0 %v352
      %v451 = vpop.f32.mrb[0].mxu0
      %v452 = vadd.f32 0.0, %v451
      %v453 = vpop.f32.mrb[0].mxu0
      %v454 = vpop.f32.mrb[0].mxu0
      %v455 = vadd.f32 0.0, %v454
      %v456 = vpop.f32.mrb[0].mxu0
      %457 = vmatprep.mubr.bf16.mxu0 0
      %458 = vmatmul.mubr.bf16.gmra.mrb[0].mxu0 %v355
      %v459 = vpop.f32.mrb[0].mxu0
      %v460 = vadd.f32 0.0, %v459
      %v461 = vpop.f32.mrb[0].mxu0
      %v462 = vpop.f32.mrb[0].mxu0
      %v463 = vadd.f32 0.0, %v462
      %v464 = vpop.f32.mrb[0].mxu0
      %465 = vmatprep.mubr.bf16.mxu0 0
      %466 = vmatmul.mubr.bf16.gmra.mrb[0].mxu0 %v358
      %v467 = vpop.f32.mrb[0].mxu0
      %v468 = vadd.f32 0.0, %v467
      %v469 = vpop.f32.mrb[0].mxu0
      %v470 = vpop.f32.mrb[0].mxu0
      %v471 = vadd.f32 0.0, %v470
      %v472 = vpop.f32.mrb[0].mxu0
      %473 = vmatprep.mubr.bf16.mxu0 0
      %474 = vmatmul.mubr.bf16.gmra.mrb[0].mxu0 %v361
      %v475 = vpop.f32.mrb[0].mxu0
      %v476 = vadd.f32 0.0, %v475
      %v477 = vpop.f32.mrb[0].mxu0
      %v478 = vpop.f32.mrb[0].mxu0
      %v479 = vadd.f32 0.0, %v478
      %v480 = vpop.f32.mrb[0].mxu0
      %481 = vmatprep.mubr.bf16.mxu0 0
      %482 = vmatmul.mubr.bf16.gmra.mrb[0].mxu0 %v364
      %v483 = vpop.f32.mrb[0].mxu0
      %v484 = vadd.f32 0.0, %v483
      %v485 = vpop.f32.mrb[0].mxu0
      %v486 = vpop.f32.mrb[0].mxu0
      %v487 = vadd.f32 0.0, %v486
      %v488 = vpop.f32.mrb[0].mxu0
      %489 = vmatprep.mubr.bf16.mxu0 0
      %490 = vmatmul.mubr.bf16.gmra.mrb[0].mxu0 %v367
      %v491 = vpop.f32.mrb[0].mxu0
      %v492 = vadd.f32 0.0, %v491
      %v493 = vpop.f32.mrb[0].mxu0
      %v494 = vpop.f32.mrb[0].mxu0
      %v495 = vadd.f32 0.0, %v494
      %v496 = vpop.f32.mrb[0].mxu0
      %497 = vmatprep.mubr.bf16.mxu0 0
      %498 = vmatmul.mubr.bf16.gmra.mrb[0].mxu0 %v370
      %v499 = vpop.f32.mrb[0].mxu0
      %v500 = vadd.f32 0.0, %v499
      %v501 = vpop.f32.mrb[0].mxu0
      %v502 = vpop.f32.mrb[0].mxu0
      %v503 = vadd.f32 0.0, %v502
      %v504 = vpop.f32.mrb[0].mxu0
      %505 = vmatprep.mubr.bf16.mxu0 0
      %506 = vmatmul.mubr.bf16.gmra.mrb[0].mxu0 %v373
      %v507 = vpop.f32.mrb[0].mxu0
      %v508 = vadd.f32 0.0, %v507
      %v509 = vpop.f32.mrb[0].mxu0
      %v510 = vpop.f32.mrb[0].mxu0
      %v511 = vadd.f32 0.0, %v510
      %v512 = vpop.f32.mrb[0].mxu0
      %513 = vmatprep.mubr.bf16.mxu0 0
      %514 = vmatmul.mubr.bf16.gmra.mrb[0].mxu0 %v376
      %v515 = vpop.f32.mrb[0].mxu0
      %v516 = vadd.f32 0.0, %v515
      %v517 = vpop.f32.mrb[0].mxu0
      %v518 = vpop.f32.mrb[0].mxu0
      %v519 = vadd.f32 0.0, %v518
      %v520 = vpop.f32.mrb[0].mxu0
      %521 = vmatprep.mubr.bf16.mxu0 0
      %522 = vmatmul.mubr.bf16.gmra.mrb[0].mxu0 %v379
      %v523 = vpop.f32.mrb[0].mxu0
      %v524 = vadd.f32 0.0, %v523
      %v525 = vpop.f32.mrb[0].mxu0
      %v526 = vpop.f32.mrb[0].mxu0
      %v527 = vadd.f32 0.0, %v526
      %v528 = vpop.f32.mrb[0].mxu0
      %529 = vmatprep.mubr.bf16.mxu0 0
      %530 = vmatmul.mubr.bf16.gmra.mrb[0].mxu0 %v382
      %v531 = vpop.f32.mrb[0].mxu0
      %v532 = vadd.f32 0.0, %v531
      %v533 = vpop.f32.mrb[0].mxu0
      %v534 = vpop.f32.mrb[0].mxu0
      %v535 = vadd.f32 0.0, %v534
      %v536 = vpop.f32.mrb[0].mxu0
      %537 = vmatprep.mubr.bf16.mxu0 0
      %538 = vmatmul.mubr.bf16.gmra.mrb[0].mxu0 %v385
      %v539 = vpop.f32.mrb[0].mxu0
      %v540 = vadd.f32 0.0, %v539
      %v541 = vpop.f32.mrb[0].mxu0
      %v542 = vpop.f32.mrb[0].mxu0
      %v543 = vadd.f32 0.0, %v542
      %v544 = vpop.f32.mrb[0].mxu0
      %545 = vmatprep.mubr.bf16.mxu0 0
      %546 = vmatmul.mubr.bf16.gmra.mrb[0].mxu0 %v388
      %v547 = vpop.f32.mrb[0].mxu0
      %v548 = vadd.f32 0.0, %v547
      %v549 = vpop.f32.mrb[0].mxu0
      %v550 = vpop.f32.mrb[0].mxu0
      %v551 = vadd.f32 0.0, %v550
      %v552 = vpop.f32.mrb[0].mxu0
      %553 = vmatprep.mubr.bf16.mxu0 0
      %554 = vmatmul.mubr.bf16.gmra.mrb[0].mxu0 %v391
      %v555 = vpop.f32.mrb[0].mxu0
      %v556 = vadd.f32 0.0, %v555
      %v557 = vpop.f32.mrb[0].mxu0
      %v558 = vpop.f32.mrb[0].mxu0
      %v559 = vadd.f32 0.0, %v558
      %v560 = vpop.f32.mrb[0].mxu0
      %561 = vmatprep.mubr.bf16.mxu0 0
      %562 = vmatmul.mubr.bf16.gmra.mrb[0].mxu0 %v394
      %v563 = vpop.f32.mrb[0].mxu0
      %v564 = vadd.f32 0.0, %v563
      %v565 = vpop.f32.mrb[0].mxu0
      %v566 = vpop.f32.mrb[0].mxu0
      %v567 = vadd.f32 0.0, %v566
      %v568 = vpop.f32.mrb[0].mxu0
      %569 = vmatprep.mubr.bf16.mxu0 0
      %570 = vmatmul.mubr.bf16.gmra.mrb[0].mxu0 %v397
      %v571 = vpop.f32.mrb[0].mxu0
      %v572 = vadd.f32 0.0, %v571
      %v573 = vpop.f32.mrb[0].mxu0
      %v574 = vpop.f32.mrb[0].mxu0
      %v575 = vadd.f32 0.0, %v574
      %v576 = vpop.f32.mrb[0].mxu0
      %577 = vmatprep.mubr.bf16.mxu0 0
      %578 = vmatmul.mubr.bf16.gmra.mrb[0].mxu0 %v400
      %v579 = vpop.f32.mrb[0].mxu0
      %v580 = vadd.f32 0.0, %v579
      %v581 = vpop.f32.mrb[0].mxu0
      %v582 = vpop.f32.mrb[0].mxu0
      %v583 = vadd.f32 0.0, %v582
      %v584 = vpop.f32.mrb[0].mxu0
      %585 = vmatprep.mubr.bf16.mxu0 0
      %586 = vmatmul.mubr.bf16.gmra.mrb[0].mxu0 %v403
      %v587 = vpop.f32.mrb[0].mxu0
      %v588 = vadd.f32 0.0, %v587
      %v589 = vpop.f32.mrb[0].mxu0
      %v590 = vpop.f32.mrb[0].mxu0
      %v591 = vpop.f32.mrb[0].mxu0
      %592 = vdwg.mxu0
      %v594 = vsel %vm347, %v209, 0
      %v597 = vsel %vm347, %v210, 0
      %v600 = vsel %vm347, %v211, 0
      %v603 = vsel %vm347, %v212, 0
      %v606 = vsel %vm347, %v213, 0
      %v609 = vsel %vm347, %v214, 0
      %v612 = vsel %vm347, %v215, 0
      %v615 = vsel %vm347, %v216, 0
      %v618 = vsel %vm347, %v217, 0
      %v621 = vsel %vm347, %v218, 0
      %v624 = vsel %vm347, %v219, 0
      %v627 = vsel %vm347, %v220, 0
      %v630 = vsel %vm347, %v221, 0
      %v633 = vsel %vm347, %v222, 0
      %v636 = vsel %vm347, %v223, 0
      %v639 = vsel %vm347, %v224, 0
      %v642 = vsel %vm347, %v225, 0
      %v645 = vsel %vm347, %v226, 0
      %v648 = vsel %vm347, %v227, 0
      %v651 = vsel %vm405, %v344, 0
      %653 = vmatprep.subr.bf16.mxu0 0
      %654 = vmatpush1.bf16.msra.mxu0 %v651
      %655 = vmatprep.subr.bf16.mxu0 0
      %656 = vmatpush1.bf16.msra.mxu0 0
      %657 = vmatprep.subr.bf16.mxu0 0
      %658 = vmatpush1.bf16.msra.mxu0 0
      %659 = vmatprep.subr.bf16.mxu0 0
      %660 = vmatpush1.bf16.msra.mxu0 0
      %661 = vmatprep.subr.bf16.mxu0 0
      %662 = vmatpush1.bf16.msra.mxu0 0
      %663 = vmatprep.subr.bf16.mxu0 0
      %664 = vmatpush1.bf16.msra.mxu0 0
      %665 = vmatprep.subr.bf16.mxu0 0
      %666 = vmatpush1.bf16.msra.mxu0 0
      %667 = vmatprep.subr.bf16.mxu0 0
      %668 = vmatpush1.bf16.msra.mxu0 0
      %669 = vmatprep.subr.bf16.mxu0 0
      %670 = vmatpush1.bf16.msra.mxu0 0
      %671 = vmatprep.subr.bf16.mxu0 0
      %672 = vmatpush1.bf16.msra.mxu0 0
      %673 = vmatprep.subr.bf16.mxu0 0
      %674 = vmatpush1.bf16.msra.mxu0 0
      %675 = vmatprep.subr.bf16.mxu0 0
      %676 = vmatpush1.bf16.msra.mxu0 0
      %677 = vmatprep.subr.bf16.mxu0 0
      %678 = vmatpush1.bf16.msra.mxu0 0
      %679 = vmatprep.subr.bf16.mxu0 0
      %680 = vmatpush1.bf16.msra.mxu0 0
      %681 = vmatprep.subr.bf16.mxu0 0
      %682 = vmatpush1.bf16.msra.mxu0 0
      %683 = vmatprep.subr.bf16.mxu0 0
      %684 = vmatpush1.bf16.msra.mxu0 0
      %685 = vmatprep.mubr.bf16.mxu0 0
      %686 = vmatmul.mubr.bf16.gmra.mrb[0].mxu0 %v594
      %v687 = vpop.f32.mrb[0].mxu0
      %v688 = vadd.f32 %v444, %v687
      %v689 = vpop.f32.mrb[0].mxu0
      %v690 = vpop.f32.mrb[0].mxu0
      %v691 = vadd.f32 %v447, %v690
      %v692 = vpop.f32.mrb[0].mxu0
      %693 = vmatprep.mubr.bf16.mxu0 0
      %694 = vmatmul.mubr.bf16.gmra.mrb[0].mxu0 %v597
      %v695 = vpop.f32.mrb[0].mxu0
      %v696 = vadd.f32 %v452, %v695
      %v697 = vpop.f32.mrb[0].mxu0
      %v698 = vpop.f32.mrb[0].mxu0
      %v699 = vadd.f32 %v455, %v698
      %v700 = vpop.f32.mrb[0].mxu0
      %701 = vmatprep.mubr.bf16.mxu0 0
      %702 = vmatmul.mubr.bf16.gmra.mrb[0].mxu0 %v600
      %v703 = vpop.f32.mrb[0].mxu0
      %v704 = vadd.f32 %v460, %v703
      %v705 = vpop.f32.mrb[0].mxu0
      %v706 = vpop.f32.mrb[0].mxu0
      %v707 = vadd.f32 %v463, %v706
      %v708 = vpop.f32.mrb[0].mxu0
      %709 = vmatprep.mubr.bf16.mxu0 0
      %710 = vmatmul.mubr.bf16.gmra.mrb[0].mxu0 %v603
      %v711 = vpop.f32.mrb[0].mxu0
      %v712 = vadd.f32 %v468, %v711
      %v713 = vpop.f32.mrb[0].mxu0
      %v714 = vpop.f32.mrb[0].mxu0
      %v715 = vadd.f32 %v471, %v714
      %v716 = vpop.f32.mrb[0].mxu0
      %717 = vmatprep.mubr.bf16.mxu0 0
      %718 = vmatmul.mubr.bf16.gmra.mrb[0].mxu0 %v606
      %v719 = vpop.f32.mrb[0].mxu0
      %v720 = vadd.f32 %v476, %v719
      %v721 = vpop.f32.mrb[0].mxu0
      %v722 = vpop.f32.mrb[0].mxu0
      %v723 = vadd.f32 %v479, %v722
      %v724 = vpop.f32.mrb[0].mxu0
      %725 = vmatprep.mubr.bf16.mxu0 0
      %726 = vmatmul.mubr.bf16.gmra.mrb[0].mxu0 %v609
      %v727 = vpop.f32.mrb[0].mxu0
      %v728 = vadd.f32 %v484, %v727
      %v729 = vpop.f32.mrb[0].mxu0
      %v730 = vpop.f32.mrb[0].mxu0
      %v731 = vadd.f32 %v487, %v730
      %v732 = vpop.f32.mrb[0].mxu0
      %733 = vmatprep.mubr.bf16.mxu0 0
      %734 = vmatmul.mubr.bf16.gmra.mrb[0].mxu0 %v612
      %v735 = vpop.f32.mrb[0].mxu0
      %v736 = vadd.f32 %v492, %v735
      %v737 = vpop.f32.mrb[0].mxu0
      %v738 = vpop.f32.mrb[0].mxu0
      %v739 = vadd.f32 %v495, %v738
      %v740 = vpop.f32.mrb[0].mxu0
      %741 = vmatprep.mubr.bf16.mxu0 0
      %742 = vmatmul.mubr.bf16.gmra.mrb[0].mxu0 %v615
      %v743 = vpop.f32.mrb[0].mxu0
      %v744 = vadd.f32 %v500, %v743
      %v745 = vpop.f32.mrb[0].mxu0
      %v746 = vpop.f32.mrb[0].mxu0
      %v747 = vadd.f32 %v503, %v746
      %v748 = vpop.f32.mrb[0].mxu0
      %749 = vmatprep.mubr.bf16.mxu0 0
      %750 = vmatmul.mubr.bf16.gmra.mrb[0].mxu0 %v618
      %v751 = vpop.f32.mrb[0].mxu0
      %v752 = vadd.f32 %v508, %v751
      %v753 = vpop.f32.mrb[0].mxu0
      %v754 = vpop.f32.mrb[0].mxu0
      %v755 = vadd.f32 %v511, %v754
      %v756 = vpop.f32.mrb[0].mxu0
      %757 = vmatprep.mubr.bf16.mxu0 0
      %758 = vmatmul.mubr.bf16.gmra.mrb[0].mxu0 %v621
      %v759 = vpop.f32.mrb[0].mxu0
      %v760 = vadd.f32 %v516, %v759
      %v761 = vpop.f32.mrb[0].mxu0
      %v762 = vpop.f32.mrb[0].mxu0
      %v763 = vadd.f32 %v519, %v762
      %v764 = vpop.f32.mrb[0].mxu0
      %765 = vmatprep.mubr.bf16.mxu0 0
      %766 = vmatmul.mubr.bf16.gmra.mrb[0].mxu0 %v624
      %v767 = vpop.f32.mrb[0].mxu0
      %v768 = vadd.f32 %v524, %v767
      %v769 = vpop.f32.mrb[0].mxu0
      %v770 = vpop.f32.mrb[0].mxu0
      %v771 = vadd.f32 %v527, %v770
      %v772 = vpop.f32.mrb[0].mxu0
      %773 = vmatprep.mubr.bf16.mxu0 0
      %774 = vmatmul.mubr.bf16.gmra.mrb[0].mxu0 %v627
      %v775 = vpop.f32.mrb[0].mxu0
      %v776 = vadd.f32 %v532, %v775
      %v777 = vpop.f32.mrb[0].mxu0
      %v778 = vpop.f32.mrb[0].mxu0
      %v779 = vadd.f32 %v535, %v778
      %v780 = vpop.f32.mrb[0].mxu0
      %781 = vmatprep.mubr.bf16.mxu0 0
      %782 = vmatmul.mubr.bf16.gmra.mrb[0].mxu0 %v630
      %v783 = vpop.f32.mrb[0].mxu0
      %v784 = vadd.f32 %v540, %v783
      %v785 = vpop.f32.mrb[0].mxu0
      %v786 = vpop.f32.mrb[0].mxu0
      %v787 = vadd.f32 %v543, %v786
      %v788 = vpop.f32.mrb[0].mxu0
      %789 = vmatprep.mubr.bf16.mxu0 0
      %790 = vmatmul.mubr.bf16.gmra.mrb[0].mxu0 %v633
      %v791 = vpop.f32.mrb[0].mxu0
      %v792 = vadd.f32 %v548, %v791
      %v793 = vpop.f32.mrb[0].mxu0
      %v794 = vpop.f32.mrb[0].mxu0
      %v795 = vadd.f32 %v551, %v794
      %v796 = vpop.f32.mrb[0].mxu0
      %797 = vmatprep.mubr.bf16.mxu0 0
      %798 = vmatmul.mubr.bf16.gmra.mrb[0].mxu0 %v636
      %v799 = vpop.f32.mrb[0].mxu0
      %v800 = vadd.f32 %v556, %v799
      %v801 = vpop.f32.mrb[0].mxu0
      %v802 = vpop.f32.mrb[0].mxu0
      %v803 = vadd.f32 %v559, %v802
      %v804 = vpop.f32.mrb[0].mxu0
      %805 = vmatprep.mubr.bf16.mxu0 0
      %806 = vmatmul.mubr.bf16.gmra.mrb[0].mxu0 %v639
      %v807 = vpop.f32.mrb[0].mxu0
      %v808 = vadd.f32 %v564, %v807
      %v809 = vpop.f32.mrb[0].mxu0
      %v810 = vpop.f32.mrb[0].mxu0
      %v811 = vadd.f32 %v567, %v810
      %v812 = vpop.f32.mrb[0].mxu0
      %813 = vmatprep.mubr.bf16.mxu0 0
      %814 = vmatmul.mubr.bf16.gmra.mrb[0].mxu0 %v642
      %v815 = vpop.f32.mrb[0].mxu0
      %v816 = vadd.f32 %v572, %v815
      %v817 = vpop.f32.mrb[0].mxu0
      %v818 = vpop.f32.mrb[0].mxu0
      %v819 = vadd.f32 %v575, %v818
      %v820 = vpop.f32.mrb[0].mxu0
      %821 = vmatprep.mubr.bf16.mxu0 0
      %822 = vmatmul.mubr.bf16.gmra.mrb[0].mxu0 %v645
      %v823 = vpop.f32.mrb[0].mxu0
      %v824 = vadd.f32 %v580, %v823
      %v825 = vpop.f32.mrb[0].mxu0
      %v826 = vpop.f32.mrb[0].mxu0
      %v827 = vadd.f32 %v583, %v826
      %v828 = vpop.f32.mrb[0].mxu0
      %829 = vmatprep.mubr.bf16.mxu0 0
      %830 = vmatmul.mubr.bf16.gmra.mrb[0].mxu0 %v648
      %v831 = vpop.f32.mrb[0].mxu0
      %v832 = vadd.f32 %v588, %v831
      %v833 = vpop.f32.mrb[0].mxu0
      %v834 = vpop.f32.mrb[0].mxu0
      %v835 = vpop.f32.mrb[0].mxu0
      %836 = vdwg.mxu0
      %s837 = scalar_lea.vmem %s1, 8
      %v838 = vld [vmem:[%s837] sm:$0xf]
      %v840 = vsel %vm347, %v286, 0
      %v843 = vsel %vm347, %v287, 0
      %v846 = vsel %vm405, %v838, 0
      %848 = vmatprep.subr.bf16.mxu0 0
      %849 = vmatpush1.bf16.msra.mxu0 %v846
      %850 = vmatprep.subr.bf16.mxu0 0
      %851 = vmatpush1.bf16.msra.mxu0 0
      %852 = vmatprep.subr.bf16.mxu0 0
      %853 = vmatpush1.bf16.msra.mxu0 0
      %854 = vmatprep.subr.bf16.mxu0 0
      %855 = vmatpush1.bf16.msra.mxu0 0
      %856 = vmatprep.subr.bf16.mxu0 0
      %857 = vmatpush1.bf16.msra.mxu0 0
      %858 = vmatprep.subr.bf16.mxu0 0
      %859 = vmatpush1.bf16.msra.mxu0 0
      %860 = vmatprep.subr.bf16.mxu0 0
      %861 = vmatpush1.bf16.msra.mxu0 0
      %862 = vmatprep.subr.bf16.mxu0 0
      %863 = vmatpush1.bf16.msra.mxu0 0
      %864 = vmatprep.subr.bf16.mxu0 0
      %865 = vmatpush1.bf16.msra.mxu0 0
      %866 = vmatprep.subr.bf16.mxu0 0
      %867 = vmatpush1.bf16.msra.mxu0 0
      %868 = vmatprep.subr.bf16.mxu0 0
      %869 = vmatpush1.bf16.msra.mxu0 0
      %870 = vmatprep.subr.bf16.mxu0 0
      %871 = vmatpush1.bf16.msra.mxu0 0
      %872 = vmatprep.subr.bf16.mxu0 0
      %873 = vmatpush1.bf16.msra.mxu0 0
      %874 = vmatprep.subr.bf16.mxu0 0
      %875 = vmatpush1.bf16.msra.mxu0 0
      %876 = vmatprep.subr.bf16.mxu0 0
      %877 = vmatpush1.bf16.msra.mxu0 0
      %878 = vmatprep.subr.bf16.mxu0 0
      %879 = vmatpush1.bf16.msra.mxu0 0
      %880 = vmatprep.mubr.bf16.mxu0 0
      %881 = vmatmul.mubr.bf16.gmra.mrb[0].mxu0 %v352
      %v882 = vpop.f32.mrb[0].mxu0
      %v883 = vadd.f32 0.0, %v882
      %v884 = vpop.f32.mrb[0].mxu0
      %v885 = vpop.f32.mrb[0].mxu0
      %v886 = vadd.f32 0.0, %v885
      %v887 = vpop.f32.mrb[0].mxu0
      %888 = vmatprep.mubr.bf16.mxu0 0
      %889 = vmatmul.mubr.bf16.gmra.mrb[0].mxu0 %v355
      %v890 = vpop.f32.mrb[0].mxu0
      %v891 = vadd.f32 0.0, %v890
      %v892 = vpop.f32.mrb[0].mxu0
      %v893 = vpop.f32.mrb[0].mxu0
      %v894 = vadd.f32 0.0, %v893
      %v895 = vpop.f32.mrb[0].mxu0
      %896 = vmatprep.mubr.bf16.mxu0 0
      %897 = vmatmul.mubr.bf16.gmra.mrb[0].mxu0 %v358
      %v898 = vpop.f32.mrb[0].mxu0
      %v899 = vadd.f32 0.0, %v898
      %v900 = vpop.f32.mrb[0].mxu0
      %v901 = vpop.f32.mrb[0].mxu0
      %v902 = vadd.f32 0.0, %v901
      %v903 = vpop.f32.mrb[0].mxu0
      %904 = vmatprep.mubr.bf16.mxu0 0
      %905 = vmatmul.mubr.bf16.gmra.mrb[0].mxu0 %v361
      %v906 = vpop.f32.mrb[0].mxu0
      %v907 = vadd.f32 0.0, %v906
      %v908 = vpop.f32.mrb[0].mxu0
      %v909 = vpop.f32.mrb[0].mxu0
      %v910 = vadd.f32 0.0, %v909
      %v911 = vpop.f32.mrb[0].mxu0
      %912 = vmatprep.mubr.bf16.mxu0 0
      %913 = vmatmul.mubr.bf16.gmra.mrb[0].mxu0 %v364
      %v914 = vpop.f32.mrb[0].mxu0
      %v915 = vadd.f32 0.0, %v914
      %v916 = vpop.f32.mrb[0].mxu0
      %v917 = vpop.f32.mrb[0].mxu0
      %v918 = vadd.f32 0.0, %v917
      %v919 = vpop.f32.mrb[0].mxu0
      %920 = vmatprep.mubr.bf16.mxu0 0
      %921 = vmatmul.mubr.bf16.gmra.mrb[0].mxu0 %v367
      %v922 = vpop.f32.mrb[0].mxu0
      %v923 = vadd.f32 0.0, %v922
      %v924 = vpop.f32.mrb[0].mxu0
      %v925 = vpop.f32.mrb[0].mxu0
      %v926 = vadd.f32 0.0, %v925
      %v927 = vpop.f32.mrb[0].mxu0
      %928 = vmatprep.mubr.bf16.mxu0 0
      %929 = vmatmul.mubr.bf16.gmra.mrb[0].mxu0 %v370
      %v930 = vpop.f32.mrb[0].mxu0
      %v931 = vadd.f32 0.0, %v930
      %v932 = vpop.f32.mrb[0].mxu0
      %v933 = vpop.f32.mrb[0].mxu0
      %v934 = vadd.f32 0.0, %v933
      %v935 = vpop.f32.mrb[0].mxu0
      %936 = vmatprep.mubr.bf16.mxu0 0
      %937 = vmatmul.mubr.bf16.gmra.mrb[0].mxu0 %v373
      %v938 = vpop.f32.mrb[0].mxu0
      %v939 = vadd.f32 0.0, %v938
      %v940 = vpop.f32.mrb[0].mxu0
      %v941 = vpop.f32.mrb[0].mxu0
      %v942 = vadd.f32 0.0, %v941
      %v943 = vpop.f32.mrb[0].mxu0
      %944 = vmatprep.mubr.bf16.mxu0 0
      %945 = vmatmul.mubr.bf16.gmra.mrb[0].mxu0 %v376
      %v946 = vpop.f32.mrb[0].mxu0
      %v947 = vadd.f32 0.0, %v946
      %v948 = vpop.f32.mrb[0].mxu0
      %v949 = vpop.f32.mrb[0].mxu0
      %v950 = vadd.f32 0.0, %v949
      %v951 = vpop.f32.mrb[0].mxu0
      %952 = vmatprep.mubr.bf16.mxu0 0
      %953 = vmatmul.mubr.bf16.gmra.mrb[0].mxu0 %v379
      %v954 = vpop.f32.mrb[0].mxu0
      %v955 = vadd.f32 0.0, %v954
      %v956 = vpop.f32.mrb[0].mxu0
      %v957 = vpop.f32.mrb[0].mxu0
      %v958 = vadd.f32 0.0, %v957
      %v959 = vpop.f32.mrb[0].mxu0
      %960 = vmatprep.mubr.bf16.mxu0 0
      %961 = vmatmul.mubr.bf16.gmra.mrb[0].mxu0 %v382
      %v962 = vpop.f32.mrb[0].mxu0
      %v963 = vadd.f32 0.0, %v962
      %v964 = vpop.f32.mrb[0].mxu0
      %v965 = vpop.f32.mrb[0].mxu0
      %v966 = vadd.f32 0.0, %v965
      %v967 = vpop.f32.mrb[0].mxu0
      %968 = vmatprep.mubr.bf16.mxu0 0
      %969 = vmatmul.mubr.bf16.gmra.mrb[0].mxu0 %v385
      %v970 = vpop.f32.mrb[0].mxu0
      %v971 = vadd.f32 0.0, %v970
      %v972 = vpop.f32.mrb[0].mxu0
      %v973 = vpop.f32.mrb[0].mxu0
      %v974 = vadd.f32 0.0, %v973
      %v975 = vpop.f32.mrb[0].mxu0
      %976 = vmatprep.mubr.bf16.mxu0 0
      %977 = vmatmul.mubr.bf16.gmra.mrb[0].mxu0 %v388
      %v978 = vpop.f32.mrb[0].mxu0
      %v979 = vadd.f32 0.0, %v978
      %v980 = vpop.f32.mrb[0].mxu0
      %v981 = vpop.f32.mrb[0].mxu0
      %v982 = vadd.f32 0.0, %v981
      %v983 = vpop.f32.mrb[0].mxu0
      %984 = vmatprep.mubr.bf16.mxu0 0
      %985 = vmatmul.mubr.bf16.gmra.mrb[0].mxu0 %v391
      %v986 = vpop.f32.mrb[0].mxu0
      %v987 = vadd.f32 0.0, %v986
      %v988 = vpop.f32.mrb[0].mxu0
      %v989 = vpop.f32.mrb[0].mxu0
      %v990 = vadd.f32 0.0, %v989
      %v991 = vpop.f32.mrb[0].mxu0
      %992 = vmatprep.mubr.bf16.mxu0 0
      %993 = vmatmul.mubr.bf16.gmra.mrb[0].mxu0 %v394
      %v994 = vpop.f32.mrb[0].mxu0
      %v995 = vadd.f32 0.0, %v994
      %v996 = vpop.f32.mrb[0].mxu0
      %v997 = vpop.f32.mrb[0].mxu0
      %v998 = vadd.f32 0.0, %v997
      %v999 = vpop.f32.mrb[0].mxu0
      %1000 = vmatprep.mubr.bf16.mxu0 0
      %1001 = vmatmul.mubr.bf16.gmra.mrb[0].mxu0 %v397
      %v1002 = vpop.f32.mrb[0].mxu0
      %v1003 = vadd.f32 0.0, %v1002
      %v1004 = vpop.f32.mrb[0].mxu0
      %v1005 = vpop.f32.mrb[0].mxu0
      %v1006 = vadd.f32 0.0, %v1005
      %v1007 = vpop.f32.mrb[0].mxu0
      %1008 = vmatprep.mubr.bf16.mxu0 0
      %1009 = vmatmul.mubr.bf16.gmra.mrb[0].mxu0 %v400
      %v1010 = vpop.f32.mrb[0].mxu0
      %v1011 = vadd.f32 0.0, %v1010
      %v1012 = vpop.f32.mrb[0].mxu0
      %v1013 = vpop.f32.mrb[0].mxu0
      %v1014 = vadd.f32 0.0, %v1013
      %v1015 = vpop.f32.mrb[0].mxu0
      %1016 = vmatprep.mubr.bf16.mxu0 0
      %1017 = vmatmul.mubr.bf16.gmra.mrb[0].mxu0 %v840
      %v1018 = vpop.f32.mrb[0].mxu0
      %v1019 = vadd.f32 0.0, %v1018
      %v1020 = vpop.f32.mrb[0].mxu0
      %v1021 = vpop.f32.mrb[0].mxu0
      %v1022 = vadd.f32 0.0, %v1021
      %v1023 = vpop.f32.mrb[0].mxu0
      %1024 = vmatprep.mubr.bf16.mxu0 0
      %1025 = vmatmul.mubr.bf16.gmra.mrb[0].mxu0 %v843
      %v1026 = vpop.f32.mrb[0].mxu0
      %v1027 = vadd.f32 0.0, %v1026
      %v1028 = vpop.f32.mrb[0].mxu0
      %v1029 = vpop.f32.mrb[0].mxu0
      %v1030 = vpop.f32.mrb[0].mxu0
      %1031 = vdwg.mxu0
      %v1032 = vadd.f32 %v688, %v883
      %v1033 = vadd.f32 %v691, %v886
      %v1034 = vadd.f32 %v696, %v891
      %v1035 = vadd.f32 %v699, %v894
      %v1036 = vadd.f32 %v704, %v899
      %v1037 = vadd.f32 %v707, %v902
      %v1038 = vadd.f32 %v712, %v907
      %v1039 = vadd.f32 %v715, %v910
      %v1040 = vadd.f32 %v720, %v915
      %v1041 = vadd.f32 %v723, %v918
      %v1042 = vadd.f32 %v728, %v923
      %v1043 = vadd.f32 %v731, %v926
      %v1044 = vadd.f32 %v736, %v931
      %v1045 = vadd.f32 %v739, %v934
      %v1046 = vadd.f32 %v744, %v939
      %v1047 = vadd.f32 %v747, %v942
      %v1048 = vadd.f32 %v752, %v947
      %v1049 = vadd.f32 %v755, %v950
      %v1050 = vadd.f32 %v760, %v955
      %v1051 = vadd.f32 %v763, %v958
      %v1052 = vadd.f32 %v768, %v963
      %v1053 = vadd.f32 %v771, %v966
      %v1054 = vadd.f32 %v776, %v971
      %v1055 = vadd.f32 %v779, %v974
      %v1056 = vadd.f32 %v784, %v979
      %v1057 = vadd.f32 %v787, %v982
      %v1058 = vadd.f32 %v792, %v987
      %v1059 = vadd.f32 %v795, %v990
      %v1060 = vadd.f32 %v800, %v995
      %v1061 = vadd.f32 %v803, %v998
      %v1062 = vadd.f32 %v808, %v1003
      %v1063 = vadd.f32 %v811, %v1006
      %v1064 = vadd.f32 %v816, %v1011
      %v1065 = vadd.f32 %v819, %v1014
      %v1066 = vadd.f32 %v824, %v1019
      %v1067 = vadd.f32 %v827, %v1022
      %v1068 = vadd.f32 %v832, %v1027
      %s1069 = scalar_lea.vmem %s1, 12
      %v1070 = vld [vmem:[%s1069] sm:$0xf]
      %v1072 = vsel %vm347, %v325, 0
      %v1075 = vsel %vm347, %v326, 0
      %v1078 = vsel %vm347, %v327, 0
      %v1081 = vsel %vm347, %v328, 0
      %v1084 = vsel %vm347, %v329, 0
      %v1087 = vsel %vm347, %v330, 0
      %v1090 = vsel %vm347, %v331, 0
      %v1093 = vsel %vm347, %v332, 0
      %v1096 = vsel %vm347, %v333, 0
      %v1099 = vsel %vm347, %v334, 0
      %v1102 = vsel %vm347, %v335, 0
      %v1105 = vsel %vm347, %v336, 0
      %v1108 = vsel %vm347, %v337, 0
      %v1111 = vsel %vm347, %v338, 0
      %v1114 = vsel %vm347, %v339, 0
      %v1117 = vsel %vm347, %v340, 0
      %v1120 = vsel %vm347, %v341, 0
      %v1123 = vsel %vm347, %v342, 0
      %v1126 = vsel %vm347, %v343, 0
      %v1129 = vsel %vm405, %v1070, 0
      %1131 = vmatprep.subr.bf16.mxu0 0
      %1132 = vmatpush1.bf16.msra.mxu0 %v1129
      %1133 = vmatprep.subr.bf16.mxu0 0
      %1134 = vmatpush1.bf16.msra.mxu0 0
      %1135 = vmatprep.subr.bf16.mxu0 0
      %1136 = vmatpush1.bf16.msra.mxu0 0
      %1137 = vmatprep.subr.bf16.mxu0 0
      %1138 = vmatpush1.bf16.msra.mxu0 0
      %1139 = vmatprep.subr.bf16.mxu0 0
      %1140 = vmatpush1.bf16.msra.mxu0 0
      %1141 = vmatprep.subr.bf16.mxu0 0
      %1142 = vmatpush1.bf16.msra.mxu0 0
      %1143 = vmatprep.subr.bf16.mxu0 0
      %1144 = vmatpush1.bf16.msra.mxu0 0
      %1145 = vmatprep.subr.bf16.mxu0 0
      %1146 = vmatpush1.bf16.msra.mxu0 0
      %1147 = vmatprep.subr.bf16.mxu0 0
      %1148 = vmatpush1.bf16.msra.mxu0 0
      %1149 = vmatprep.subr.bf16.mxu0 0
      %1150 = vmatpush1.bf16.msra.mxu0 0
      %1151 = vmatprep.subr.bf16.mxu0 0
      %1152 = vmatpush1.bf16.msra.mxu0 0
      %1153 = vmatprep.subr.bf16.mxu0 0
      %1154 = vmatpush1.bf16.msra.mxu0 0
      %1155 = vmatprep.subr.bf16.mxu0 0
      %1156 = vmatpush1.bf16.msra.mxu0 0
      %1157 = vmatprep.subr.bf16.mxu0 0
      %1158 = vmatpush1.bf16.msra.mxu0 0
      %1159 = vmatprep.subr.bf16.mxu0 0
      %1160 = vmatpush1.bf16.msra.mxu0 0
      %1161 = vmatprep.subr.bf16.mxu0 0
      %1162 = vmatpush1.bf16.msra.mxu0 0
      %1163 = vmatprep.mubr.bf16.mxu0 0
      %1164 = vmatmul.mubr.bf16.gmra.mrb[0].mxu0 %v1072
      %v1165 = vpop.f32.mrb[0].mxu0
      %v1166 = vadd.f32 0.0, %v1165
      %v1167 = vpop.f32.mrb[0].mxu0
      %v1168 = vpop.f32.mrb[0].mxu0
      %v1169 = vadd.f32 0.0, %v1168
      %v1170 = vpop.f32.mrb[0].mxu0
      %1171 = vmatprep.mubr.bf16.mxu0 0
      %1172 = vmatmul.mubr.bf16.gmra.mrb[0].mxu0 %v1075
      %v1173 = vpop.f32.mrb[0].mxu0
      %v1174 = vadd.f32 0.0, %v1173
      %v1175 = vpop.f32.mrb[0].mxu0
      %v1176 = vpop.f32.mrb[0].mxu0
      %v1177 = vadd.f32 0.0, %v1176
      %v1178 = vpop.f32.mrb[0].mxu0
      %1179 = vmatprep.mubr.bf16.mxu0 0
      %1180 = vmatmul.mubr.bf16.gmra.mrb[0].mxu0 %v1078
      %v1181 = vpop.f32.mrb[0].mxu0
      %v1182 = vadd.f32 0.0, %v1181
      %v1183 = vpop.f32.mrb[0].mxu0
      %v1184 = vpop.f32.mrb[0].mxu0
      %v1185 = vadd.f32 0.0, %v1184
      %v1186 = vpop.f32.mrb[0].mxu0
      %1187 = vmatprep.mubr.bf16.mxu0 0
      %1188 = vmatmul.mubr.bf16.gmra.mrb[0].mxu0 %v1081
      %v1189 = vpop.f32.mrb[0].mxu0
      %v1190 = vadd.f32 0.0, %v1189
      %v1191 = vpop.f32.mrb[0].mxu0
      %v1192 = vpop.f32.mrb[0].mxu0
      %v1193 = vadd.f32 0.0, %v1192
      %v1194 = vpop.f32.mrb[0].mxu0
      %1195 = vmatprep.mubr.bf16.mxu0 0
      %1196 = vmatmul.mubr.bf16.gmra.mrb[0].mxu0 %v1084
      %v1197 = vpop.f32.mrb[0].mxu0
      %v1198 = vadd.f32 0.0, %v1197
      %v1199 = vpop.f32.mrb[0].mxu0
      %v1200 = vpop.f32.mrb[0].mxu0
      %v1201 = vadd.f32 0.0, %v1200
      %v1202 = vpop.f32.mrb[0].mxu0
      %1203 = vmatprep.mubr.bf16.mxu0 0
      %1204 = vmatmul.mubr.bf16.gmra.mrb[0].mxu0 %v1087
      %v1205 = vpop.f32.mrb[0].mxu0
      %v1206 = vadd.f32 0.0, %v1205
      %v1207 = vpop.f32.mrb[0].mxu0
      %v1208 = vpop.f32.mrb[0].mxu0
      %v1209 = vadd.f32 0.0, %v1208
      %v1210 = vpop.f32.mrb[0].mxu0
      %1211 = vmatprep.mubr.bf16.mxu0 0
      %1212 = vmatmul.mubr.bf16.gmra.mrb[0].mxu0 %v1090
      %v1213 = vpop.f32.mrb[0].mxu0
      %v1214 = vadd.f32 0.0, %v1213
      %v1215 = vpop.f32.mrb[0].mxu0
      %v1216 = vpop.f32.mrb[0].mxu0
      %v1217 = vadd.f32 0.0, %v1216
      %v1218 = vpop.f32.mrb[0].mxu0
      %1219 = vmatprep.mubr.bf16.mxu0 0
      %1220 = vmatmul.mubr.bf16.gmra.mrb[0].mxu0 %v1093
      %v1221 = vpop.f32.mrb[0].mxu0
      %v1222 = vadd.f32 0.0, %v1221
      %v1223 = vpop.f32.mrb[0].mxu0
      %v1224 = vpop.f32.mrb[0].mxu0
      %v1225 = vadd.f32 0.0, %v1224
      %v1226 = vpop.f32.mrb[0].mxu0
      %1227 = vmatprep.mubr.bf16.mxu0 0
      %1228 = vmatmul.mubr.bf16.gmra.mrb[0].mxu0 %v1096
      %v1229 = vpop.f32.mrb[0].mxu0
      %v1230 = vadd.f32 0.0, %v1229
      %v1231 = vpop.f32.mrb[0].mxu0
      %v1232 = vpop.f32.mrb[0].mxu0
      %v1233 = vadd.f32 0.0, %v1232
      %v1234 = vpop.f32.mrb[0].mxu0
      %1235 = vmatprep.mubr.bf16.mxu0 0
      %1236 = vmatmul.mubr.bf16.gmra.mrb[0].mxu0 %v1099
      %v1237 = vpop.f32.mrb[0].mxu0
      %v1238 = vadd.f32 0.0, %v1237
      %v1239 = vpop.f32.mrb[0].mxu0
      %v1240 = vpop.f32.mrb[0].mxu0
      %v1241 = vadd.f32 0.0, %v1240
      %v1242 = vpop.f32.mrb[0].mxu0
      %1243 = vmatprep.mubr.bf16.mxu0 0
      %1244 = vmatmul.mubr.bf16.gmra.mrb[0].mxu0 %v1102
      %v1245 = vpop.f32.mrb[0].mxu0
      %v1246 = vadd.f32 0.0, %v1245
      %v1247 = vpop.f32.mrb[0].mxu0
      %v1248 = vpop.f32.mrb[0].mxu0
      %v1249 = vadd.f32 0.0, %v1248
      %v1250 = vpop.f32.mrb[0].mxu0
      %1251 = vmatprep.mubr.bf16.mxu0 0
      %1252 = vmatmul.mubr.bf16.gmra.mrb[0].mxu0 %v1105
      %v1253 = vpop.f32.mrb[0].mxu0
      %v1254 = vadd.f32 0.0, %v1253
      %v1255 = vpop.f32.mrb[0].mxu0
      %v1256 = vpop.f32.mrb[0].mxu0
      %v1257 = vadd.f32 0.0, %v1256
      %v1258 = vpop.f32.mrb[0].mxu0
      %1259 = vmatprep.mubr.bf16.mxu0 0
      %1260 = vmatmul.mubr.bf16.gmra.mrb[0].mxu0 %v1108
      %v1261 = vpop.f32.mrb[0].mxu0
      %v1262 = vadd.f32 0.0, %v1261
      %v1263 = vpop.f32.mrb[0].mxu0
      %v1264 = vpop.f32.mrb[0].mxu0
      %v1265 = vadd.f32 0.0, %v1264
      %v1266 = vpop.f32.mrb[0].mxu0
      %1267 = vmatprep.mubr.bf16.mxu0 0
      %1268 = vmatmul.mubr.bf16.gmra.mrb[0].mxu0 %v1111
      %v1269 = vpop.f32.mrb[0].mxu0
      %v1270 = vadd.f32 0.0, %v1269
      %v1271 = vpop.f32.mrb[0].mxu0
      %v1272 = vpop.f32.mrb[0].mxu0
      %v1273 = vadd.f32 0.0, %v1272
      %v1274 = vpop.f32.mrb[0].mxu0
      %1275 = vmatprep.mubr.bf16.mxu0 0
      %1276 = vmatmul.mubr.bf16.gmra.mrb[0].mxu0 %v1114
      %v1277 = vpop.f32.mrb[0].mxu0
      %v1278 = vadd.f32 0.0, %v1277
      %v1279 = vpop.f32.mrb[0].mxu0
      %v1280 = vpop.f32.mrb[0].mxu0
      %v1281 = vadd.f32 0.0, %v1280
      %v1282 = vpop.f32.mrb[0].mxu0
      %1283 = vmatprep.mubr.bf16.mxu0 0
      %1284 = vmatmul.mubr.bf16.gmra.mrb[0].mxu0 %v1117
      %v1285 = vpop.f32.mrb[0].mxu0
      %v1286 = vadd.f32 0.0, %v1285
      %v1287 = vpop.f32.mrb[0].mxu0
      %v1288 = vpop.f32.mrb[0].mxu0
      %v1289 = vadd.f32 0.0, %v1288
      %v1290 = vpop.f32.mrb[0].mxu0
      %1291 = vmatprep.mubr.bf16.mxu0 0
      %1292 = vmatmul.mubr.bf16.gmra.mrb[0].mxu0 %v1120
      %v1293 = vpop.f32.mrb[0].mxu0
      %v1294 = vadd.f32 0.0, %v1293
      %v1295 = vpop.f32.mrb[0].mxu0
      %v1296 = vpop.f32.mrb[0].mxu0
      %v1297 = vadd.f32 0.0, %v1296
      %v1298 = vpop.f32.mrb[0].mxu0
      %1299 = vmatprep.mubr.bf16.mxu0 0
      %1300 = vmatmul.mubr.bf16.gmra.mrb[0].mxu0 %v1123
      %v1301 = vpop.f32.mrb[0].mxu0
      %v1302 = vadd.f32 0.0, %v1301
      %v1303 = vpop.f32.mrb[0].mxu0
      %v1304 = vpop.f32.mrb[0].mxu0
      %v1305 = vadd.f32 0.0, %v1304
      %v1306 = vpop.f32.mrb[0].mxu0
      %1307 = vmatprep.mubr.bf16.mxu0 0
      %1308 = vmatmul.mubr.bf16.gmra.mrb[0].mxu0 %v1126
      %v1309 = vpop.f32.mrb[0].mxu0
      %v1310 = vadd.f32 0.0, %v1309
      %v1311 = vpop.f32.mrb[0].mxu0
      %v1312 = vpop.f32.mrb[0].mxu0
      %v1313 = vpop.f32.mrb[0].mxu0
      %1314 = vdwg.mxu0
      %v1315 = vadd.f32 %v1032, %v1166
      %v1316 = vadd.f32 %v1033, %v1169
      %v1317 = vadd.f32 %v1034, %v1174
      %v1318 = vadd.f32 %v1035, %v1177
      %v1319 = vadd.f32 %v1036, %v1182
      %v1320 = vadd.f32 %v1037, %v1185
      %v1321 = vadd.f32 %v1038, %v1190
      %v1322 = vadd.f32 %v1039, %v1193
      %v1323 = vadd.f32 %v1040, %v1198
      %v1324 = vadd.f32 %v1041, %v1201
      %v1325 = vadd.f32 %v1042, %v1206
      %v1326 = vadd.f32 %v1043, %v1209
      %v1327 = vadd.f32 %v1044, %v1214
      %v1328 = vadd.f32 %v1045, %v1217
      %v1329 = vadd.f32 %v1046, %v1222
      %v1330 = vadd.f32 %v1047, %v1225
      %v1331 = vadd.f32 %v1048, %v1230
      %v1332 = vadd.f32 %v1049, %v1233
      %v1333 = vadd.f32 %v1050, %v1238
      %v1334 = vadd.f32 %v1051, %v1241
      %v1335 = vadd.f32 %v1052, %v1246
      %v1336 = vadd.f32 %v1053, %v1249
      %v1337 = vadd.f32 %v1054, %v1254
      %v1338 = vadd.f32 %v1055, %v1257
      %v1339 = vadd.f32 %v1056, %v1262
      %v1340 = vadd.f32 %v1057, %v1265
      %v1341 = vadd.f32 %v1058, %v1270
      %v1342 = vadd.f32 %v1059, %v1273
      %v1343 = vadd.f32 %v1060, %v1278
      %v1344 = vadd.f32 %v1061, %v1281
      %v1345 = vadd.f32 %v1062, %v1286
      %v1346 = vadd.f32 %v1063, %v1289
      %v1347 = vadd.f32 %v1064, %v1294
      %v1348 = vadd.f32 %v1065, %v1297
      %v1349 = vadd.f32 %v1066, %v1302
      %v1350 = vadd.f32 %v1067, %v1305
      %v1351 = vadd.f32 %v1068, %v1310
      %v1352 = vld [vmem:[%s2] sm:$0x1]
      %v1354 = vlaneseq
      %v1355 = vshrl.u32 %v1354, 7
      %v1356 = vsub.s32 0, %v1355
      %v1357 = vrot.slane %v1352, %v1356
      %v1359 = vadd.f32 %v1315, %v1357
      %v1360 = vadd.f32 %v1316, %v1357
      %v1361 = vadd.f32 %v1317, %v1357
      %v1362 = vadd.f32 %v1318, %v1357
      %v1363 = vadd.f32 %v1319, %v1357
      %v1364 = vadd.f32 %v1320, %v1357
      %v1365 = vadd.f32 %v1321, %v1357
      %v1366 = vadd.f32 %v1322, %v1357
      %v1367 = vadd.f32 %v1323, %v1357
      %v1368 = vadd.f32 %v1324, %v1357
      %v1369 = vadd.f32 %v1325, %v1357
      %v1370 = vadd.f32 %v1326, %v1357
      %v1371 = vadd.f32 %v1327, %v1357
      %v1372 = vadd.f32 %v1328, %v1357
      %v1373 = vadd.f32 %v1329, %v1357
      %v1374 = vadd.f32 %v1330, %v1357
      %v1375 = vadd.f32 %v1331, %v1357
      %v1376 = vadd.f32 %v1332, %v1357
      %v1377 = vadd.f32 %v1333, %v1357
      %v1378 = vadd.f32 %v1334, %v1357
      %v1379 = vadd.f32 %v1335, %v1357
      %v1380 = vadd.f32 %v1336, %v1357
      %v1381 = vadd.f32 %v1337, %v1357
      %v1382 = vadd.f32 %v1338, %v1357
      %v1383 = vadd.f32 %v1339, %v1357
      %v1384 = vadd.f32 %v1340, %v1357
      %v1385 = vadd.f32 %v1341, %v1357
      %v1386 = vadd.f32 %v1342, %v1357
      %v1387 = vadd.f32 %v1343, %v1357
      %v1388 = vadd.f32 %v1344, %v1357
      %v1389 = vadd.f32 %v1345, %v1357
      %v1390 = vadd.f32 %v1346, %v1357
      %v1391 = vadd.f32 %v1347, %v1357
      %v1392 = vadd.f32 %v1348, %v1357
      %v1393 = vadd.f32 %v1349, %v1357
      %v1394 = vadd.f32 %v1350, %v1357
      %v1395 = vadd.f32 %v1351, %v1357
      %v1396 = vmax.f32 %v1359, 0.0
      %v1397 = vmax.f32 %v1360, 0.0
      %v1398 = vmax.f32 %v1361, 0.0
      %v1399 = vmax.f32 %v1362, 0.0
      %v1400 = vmax.f32 %v1363, 0.0
      %v1401 = vmax.f32 %v1364, 0.0
      %v1402 = vmax.f32 %v1365, 0.0
      %v1403 = vmax.f32 %v1366, 0.0
      %v1404 = vmax.f32 %v1367, 0.0
      %v1405 = vmax.f32 %v1368, 0.0
      %v1406 = vmax.f32 %v1369, 0.0
      %v1407 = vmax.f32 %v1370, 0.0
      %v1408 = vmax.f32 %v1371, 0.0
      %v1409 = vmax.f32 %v1372, 0.0
      %v1410 = vmax.f32 %v1373, 0.0
      %v1411 = vmax.f32 %v1374, 0.0
      %v1412 = vmax.f32 %v1375, 0.0
      %v1413 = vmax.f32 %v1376, 0.0
      %v1414 = vmax.f32 %v1377, 0.0
      %v1415 = vmax.f32 %v1378, 0.0
      %v1416 = vmax.f32 %v1379, 0.0
      %v1417 = vmax.f32 %v1380, 0.0
      %v1418 = vmax.f32 %v1381, 0.0
      %v1419 = vmax.f32 %v1382, 0.0
      %v1420 = vmax.f32 %v1383, 0.0
      %v1421 = vmax.f32 %v1384, 0.0
      %v1422 = vmax.f32 %v1385, 0.0
      %v1423 = vmax.f32 %v1386, 0.0
      %v1424 = vmax.f32 %v1387, 0.0
      %v1425 = vmax.f32 %v1388, 0.0
      %v1426 = vmax.f32 %v1389, 0.0
      %v1427 = vmax.f32 %v1390, 0.0
      %v1428 = vmax.f32 %v1391, 0.0
      %v1429 = vmax.f32 %v1392, 0.0
      %v1430 = vmax.f32 %v1393, 0.0
      %v1431 = vmax.f32 %v1394, 0.0
      %v1432 = vmax.f32 %v1395, 0.0
      %1433 = vst [vmem:[%s170] sm:$0xff] %v1396
      %1434 = vst [vmem:[%s170 + $0x8] sm:$0xff] %v1397
      %1435 = vst [vmem:[%s170 + $0x10] sm:$0xff] %v1398
      %1436 = vst [vmem:[%s170 + $0x18] sm:$0xff] %v1399
      %1437 = vst [vmem:[%s170 + $0x20] sm:$0xff] %v1400
      %1438 = vst [vmem:[%s170 + $0x28] sm:$0xff] %v1401
      %1439 = vst [vmem:[%s170 + $0x30] sm:$0xff] %v1402
      %1440 = vst [vmem:[%s170 + $0x38] sm:$0xff] %v1403
      %1441 = vst [vmem:[%s170 + $0x40] sm:$0xff] %v1404
      %1442 = vst [vmem:[%s170 + $0x48] sm:$0xff] %v1405
      %1443 = vst [vmem:[%s170 + $0x50] sm:$0xff] %v1406
      %1444 = vst [vmem:[%s170 + $0x58] sm:$0xff] %v1407
      %1445 = vst [vmem:[%s170 + $0x60] sm:$0xff] %v1408
      %1446 = vst [vmem:[%s170 + $0x68] sm:$0xff] %v1409
      %1447 = vst [vmem:[%s170 + $0x70] sm:$0xff] %v1410
      %1448 = vst [vmem:[%s170 + $0x78] sm:$0xff] %v1411
      %1449 = vst [vmem:[%s170 + $0x80] sm:$0xff] %v1412
      %1450 = vst [vmem:[%s170 + $0x88] sm:$0xff] %v1413
      %1451 = vst [vmem:[%s170 + $0x90] sm:$0xff] %v1414
      %1452 = vst [vmem:[%s170 + $0x98] sm:$0xff] %v1415
      %1453 = vst [vmem:[%s170 + $0xa0] sm:$0xff] %v1416
      %1454 = vst [vmem:[%s170 + $0xa8] sm:$0xff] %v1417
      %1455 = vst [vmem:[%s170 + $0xb0] sm:$0xff] %v1418
      %1456 = vst [vmem:[%s170 + $0xb8] sm:$0xff] %v1419
      %1457 = vst [vmem:[%s170 + $0xc0] sm:$0xff] %v1420
      %1458 = vst [vmem:[%s170 + $0xc8] sm:$0xff] %v1421
      %1459 = vst [vmem:[%s170 + $0xd0] sm:$0xff] %v1422
      %1460 = vst [vmem:[%s170 + $0xd8] sm:$0xff] %v1423
      %1461 = vst [vmem:[%s170 + $0xe0] sm:$0xff] %v1424
      %1462 = vst [vmem:[%s170 + $0xe8] sm:$0xff] %v1425
      %1463 = vst [vmem:[%s170 + $0xf0] sm:$0xff] %v1426
      %1464 = vst [vmem:[%s170 + $0xf8] sm:$0xff] %v1427
      %1465 = vst [vmem:[%s170 + $0x100] sm:$0xff] %v1428
      %1466 = vst [vmem:[%s170 + $0x108] sm:$0xff] %v1429
      %1467 = vst [vmem:[%s170 + $0x110] sm:$0xff] %v1430
      %1468 = vst [vmem:[%s170 + $0x118] sm:$0xff] %v1431
      %1469 = vst [vmem:[%s170 + $0x120] sm:$0xff] %v1432
      %p1470 = scmp.lt.s32.totalorder %s14, 1
      %s1471 = scalar_select %p1470, %s14, 1
      %s1472 = smul.addr %s1471, 37
      %s1473 = smul.addr %s1472, 8
      %s1474 = scalar_lea.vmem %s3, %s1473
      // Predicated region
      $region33: #{conv_up2d.1} parent=31 // pred_check
        %p1475 = pneg %p100
      $region34: #{conv_up2d.1} parent=31 // pred_check_branch
        %1477 = sbr.rel (%p1475) target = $region36
      $region35: #{conv_up2d.1} parent=31 // pred_region
        _
      $region36: #{conv_up2d.1} parent=31 // pred_fallthru
        _
    $region32: #{conv_up2d.1} parent=5 // pred_fallthru
      _
    %p1478 = scmp.le.s32.totalorder 2, %s9
    // Predicated region
    $region37: #{conv_up2d.1} parent=5 // pred_check
      %p1479 = pneg %p1478
    $region38: #{conv_up2d.1} parent=5 // pred_check_branch
      %1481 = sbr.rel (%p1479) target = $region40
    $region39: #{conv_up2d.1} parent=5 // pred_region
      %s1482 = ssub.s32 %s9, 2
      // Predicated region
      $region41: #{conv_up2d.1} parent=39 // pred_check
        %p1483 = pneg %p106
      $region42: #{conv_up2d.1} parent=39 // pred_check_branch
        %1485 = sbr.rel (%p1483) target = $region44
      $region43: #{conv_up2d.1} parent=39 // pred_region
        %p1486 = scmp.lt.s32.totalorder %s15, 1
        %s1487 = scalar_select %p1486, %s15, 1
        %s1488 = smul.addr %s1487, 37
        %s1489 = smul.addr %s1488, 8
        %s1490 = scalar_lea.vmem %s3, %s1489
      $region44: #{conv_up2d.1} parent=39 // pred_fallthru
        _
    $region40: #{conv_up2d.1} parent=5 // pred_fallthru
      _
  $region6: #{conv_up2d.1} parent=0 // loop_footer
    %s13 = sadd.s32 1, %s9
  $region7: #{conv_up2d.1} parent=0 // loop_footer_branch
    %8 = sbr.rel target = $region3
  $region8: #{conv_up2d.1} parent=0 // loop_exit
    _

</llo_original>
